<compile_context>
chip_gen: v7x
topology: tpu7x:2x2x1
jax: 0.10.0
libtpu: 0.0.40
codegen_flags: <defaults>
</compile_context>

<pallas_src>
import functools
import math

import jax
import jax.numpy as jnp
import numpy as np
from jax import lax
from jax.experimental import pallas as pl
from jax.experimental.pallas import tpu as pltpu

group_size_ratio = 1.0 / 4.0


# ----------------------------- Pallas kernel -----------------------------

def _fused_attn_kernel(x_ref, w_ref, b_ref, cq_ref, sq_ref, ck_ref, sk_ref,
                       mask_ref, o_ref, *, nh, hd):
    """One batch per grid step: QKV projection + per-head RoPE attention."""
    hid = nh * hd
    half = hd // 2

    # Fused Q/K/V projection for this batch's (S, HID) rows; weight is already in
    # the MXU-native (K, N) layout, bias add fused.
    qkv = lax.dot_general(
        x_ref[...], w_ref[...],
        dimension_numbers=(((1,), (0,)), ((), ())),
        preferred_element_type=jnp.float32,
    ) + b_ref[...]                                  # (S, 3*HID) f32

    mask = mask_ref[0]                              # (1, S) additive key bias
    cq, sq = cq_ref[...], sq_ref[...]
    ck, sk = ck_ref[...], sk_ref[...]

    # Heads iterated in-kernel (nh is tiny -> static unroll); all slices are at
    # 128-lane boundaries so they are layout-aligned views, not copies.
    for h in range(nh):
        q = qkv[:, h * hd:(h + 1) * hd]
        k = qkv[:, hid + h * hd: hid + (h + 1) * hd]
        v = qkv[:, 2 * hid + h * hd: 2 * hid + (h + 1) * hd]

        # RoPE: rotate_half(x) == lane-roll(x, D/2) with the sign of the first half
        # baked into the sin tables; the 1/sqrt(head_dim) score scale is baked into
        # the q-side tables -> 4 VPU muls + 2 adds + 2 XLU rolls.
        qr = q * cq + pltpu.roll(q, shift=half, axis=1) * sq
        kr = k * ck + pltpu.roll(k, shift=half, axis=1) * sk

        scores = lax.dot_general(
            qr, kr,
            dimension_numbers=(((1,), (1,)), ((), ())),
            preferred_element_type=jnp.float32,
        ) + mask                                    # (S, S), mask bcast over rows

        # numerically-stable softmax; one approx reciprocal per row (EUP slot).
        m = jnp.max(scores, axis=-1, keepdims=True)
        p = jnp.exp(scores - m)
        inv_l = pl.reciprocal(jnp.sum(p, axis=-1, keepdims=True), approx=True)

        ctx = jnp.dot(p * inv_l, v, preferred_element_type=jnp.float32)
        o_ref[:, h * hd:(h + 1) * hd] = ctx.astype(o_ref.dtype)
    # TODO(synk): attention-probs dropout is a no-op in eval mode; the training
    # shift path (use_full=False) and the xops flash path are not implemented.


def fused_self_attention(x2d, w_qkv_t, b_qkv, cos_q, sin_q, cos_k, sin_k,
                         mask3, b, s, nh, hd):
    """x2d: (B*S, HID) hidden states. Returns (B*S, HID) attention context."""
    hid = nh * hd
    kernel = functools.partial(_fused_attn_kernel, nh=nh, hd=hd)
    return pl.pallas_call(
        kernel,
        out_shape=jax.ShapeDtypeStruct((b * s, hid), x2d.dtype),
        grid_spec=pl.GridSpec(
            grid=(b,),
            in_specs=[
                pl.BlockSpec((s, hid), lambda bi: (bi, 0)),        # x rows of batch bi
                pl.BlockSpec((hid, 3 * hid), lambda bi: (0, 0)),   # W_qkv (constant)
                pl.BlockSpec((1, 3 * hid), lambda bi: (0, 0)),     # bias   (constant)
                pl.BlockSpec((s, hd), lambda bi: (0, 0)),          # cos_q (scale folded)
                pl.BlockSpec((s, hd), lambda bi: (0, 0)),          # sin_q (sign+scale)
                pl.BlockSpec((s, hd), lambda bi: (0, 0)),          # cos_k
                pl.BlockSpec((s, hd), lambda bi: (0, 0)),          # sin_k (sign folded)
                pl.BlockSpec((1, 1, s), lambda bi: (bi, 0, 0)),    # additive mask
            ],
            # lane-dense (S, HID) slab written straight into final (B*S, HID) layout
            out_specs=pl.BlockSpec((s, hid), lambda bi: (bi, 0)),
        ),
        compiler_params=pltpu.CompilerParams(
            dimension_semantics=("parallel",)),
    )(x2d, w_qkv_t, b_qkv, cos_q, sin_q, cos_k, sin_k, mask3)


# ----------------------------- glue (plain JAX) -----------------------------

def _raw_rotary(seq_len, head_dim, base=10000.0):
    # LlamaRotaryEmbedding with position_ids = arange(seq_len)
    inv_freq = 1.0 / (base ** (jnp.arange(0, head_dim, 2, dtype=jnp.float32) / head_dim))
    t = jnp.arange(seq_len, dtype=jnp.float32)
    freqs = jnp.einsum("i,j->ij", t, inv_freq)
    emb = jnp.concatenate([freqs, freqs], axis=-1)  # (S, D)
    return jnp.cos(emb), jnp.sin(emb)


def prepare_params(params, seq_len, dtype=jnp.float32):
    """One-time preprocessing (hoisted out of the forward hot path):
    fused (K, N)-layout QKV weight/bias and cos/sin tables with the rotate_half
    sign baked into sin and the 1/sqrt(head_dim) score scale baked into the
    q-side tables."""
    nh = params["num_heads"]
    hid = params["wq"].shape[0]
    hd = hid // nh
    # PyTorch nn.Linear weights are (Dout, Din); concat -> (3*HID, HID), then
    # transpose to the MXU-native (K, N) feed.
    w_qkv_t = jnp.concatenate([params["wq"], params["wk"], params["wv"]], axis=0).T
    b_qkv = jnp.concatenate([params["bq"], params["bk"], params["bv"]],
                            axis=0).reshape(1, 3 * hid)

    scale = float(hd) ** -0.5
    cos, sin = _raw_rotary(seq_len, hd)
    sign = jnp.where(jnp.arange(hd) < hd // 2, -1.0, 1.0)
    sin_signed = sin * sign
    return {
        "nh": nh, "hd": hd,
        "w_qkv_t": w_qkv_t.astype(dtype),
        "b_qkv": b_qkv.astype(dtype),
        "cos_q": (cos * scale).astype(dtype),
        "sin_q": (sin_signed * scale).astype(dtype),
        "cos_k": cos.astype(dtype),
        "sin_k": sin_signed.astype(dtype),
    }


def self_attention_forward(prep, hidden_states, attention_mask):
    """attention_mask: additive mask of shape (B, 1, 1, S)."""
    b, s, hid = hidden_states.shape
    nh, hd = prep["nh"], prep["hd"]
    assert nh * hd == hid

    # group-size divisibility check from the reference module (group_size_ratio = 1/4)
    group_size = int(s * group_size_ratio)
    if group_size == 0 or s % group_size != 0:
        raise ValueError("q_len %d should be divisible by group size %d." % (s, group_size))

    if tuple(attention_mask.shape) != (b, 1, 1, s):
        raise ValueError(
            "expected additive attention_mask of shape (B,1,1,S)=(%d,1,1,%d), got %s"
            % (b, s, tuple(attention_mask.shape)))

    x2d = hidden_states.reshape(b * s, hid)
    mask3 = attention_mask.reshape(b, 1, s).astype(hidden_states.dtype)

    out2d = fused_self_attention(
        x2d, prep["w_qkv_t"], prep["b_qkv"],
        prep["cos_q"], prep["sin_q"], prep["cos_k"], prep["sin_k"],
        mask3, b, s, nh, hd)
    return out2d.reshape(b, s, hid)


def ref_forward(params, hidden_states, attention_mask):
    """Pure-JAX reference mirroring the PyTorch forward (eval mode)."""
    b, s, hid = hidden_states.shape
    nh = params["num_heads"]
    hd = hid // nh

    def lin(x, w, bb):
        return x @ w.T + bb

    def heads(x):
        return x.reshape(b, s, nh, hd).transpose(0, 2, 1, 3)

    q = heads(lin(hidden_states, params["wq"], params["bq"]))
    k = heads(lin(hidden_states, params["wk"], params["bk"]))
    v = heads(lin(hidden_states, params["wv"], params["bv"]))

    cos, sin = _raw_rotary(s, hd)
    cos = cos.astype(hidden_states.dtype)
    sin = sin.astype(hidden_states.dtype)

    def rotate_half(x):
        x1, x2 = x[..., : hd // 2], x[..., hd // 2:]
        return jnp.concatenate([-x2, x1], axis=-1)

    q = q * cos + rotate_half(q) * sin
    k = k * cos + rotate_half(k) * sin

    scores = jnp.einsum("bhqd,bhkd->bhqk", q, k) * (float(hd) ** -0.5)
    scores = scores + attention_mask  # (B,1,1,S) broadcast
    w = jax.nn.softmax(scores, axis=-1)
    out = jnp.einsum("bhqk,bhkd->bhqd", w, v)
    return out.transpose(0, 2, 1, 3).reshape(b, s, hid)


# ----------------------------------- main -----------------------------------

if __name__ == "__main__":
    # config: hidden_size=256, num_attention_heads=2 (head_dim=128),
    #         max_position_embeddings>=8, dropout inactive (eval), is_decoder=False
    B, S, NH, HD = 2, 8, 2, 128
    HID = NH * HD

    key = jax.random.PRNGKey(0)
    k_x, k_wq, k_bq, k_wk, k_bk, k_wv, k_bv = jax.random.split(key, 7)

    params = {
        "num_heads": NH,
        "wq": jax.random.normal(k_wq, (HID, HID), jnp.float32) * 0.02,
        "bq": jax.random.normal(k_bq, (HID,), jnp.float32) * 0.02,
        "wk": jax.random.normal(k_wk, (HID, HID), jnp.float32) * 0.02,
        "bk": jax.random.normal(k_bk, (HID,), jnp.float32) * 0.02,
        "wv": jax.random.normal(k_wv, (HID, HID), jnp.float32) * 0.02,
        "bv": jax.random.normal(k_bv, (HID,), jnp.float32) * 0.02,
    }

    hidden_states = jax.random.normal(k_x, (B, S, HID), jnp.float32)
    # additive attention mask (B, 1, 1, S): mask the last two key positions of batch 1
    attention_mask = jnp.zeros((B, 1, 1, S), jnp.float32).at[1, 0, 0, -2:].set(-1e9)

    # one-time parameter preparation (hoisted out of the forward hot path)
    prep = prepare_params(params, S, dtype=jnp.float32)

    out = self_attention_forward(prep, hidden_states, attention_mask)
    out = jax.block_until_ready(out)

    ref = jax.block_until_ready(ref_forward(params, hidden_states, attention_mask))
    # tolerance slightly loosened vs 1e-4 because the softmax denominator uses the
    # EUP approximate reciprocal (pl.reciprocal(..., approx=True)).
    np.testing.assert_allclose(np.asarray(out), np.asarray(ref), rtol=2e-3, atol=2e-3)

    assert out.shape == (B, S, HID)
    print("KERNEL_OK")
</pallas_src>

<mosaic_0001>
module attributes {stable_mosaic.version = 11 : i64} {
  func.func @_fused_attn_kernel(%arg0: i32, %arg1: memref<8x256xf32, #tpu.memory_space<vmem>>, %arg2: memref<256x768xf32, #tpu.memory_space<vmem>>, %arg3: memref<1x768xf32, #tpu.memory_space<vmem>>, %arg4: memref<8x128xf32, #tpu.memory_space<vmem>>, %arg5: memref<8x128xf32, #tpu.memory_space<vmem>>, %arg6: memref<8x128xf32, #tpu.memory_space<vmem>>, %arg7: memref<8x128xf32, #tpu.memory_space<vmem>>, %arg8: memref<1x1x8xf32, #tpu.memory_space<vmem>>, %arg9: memref<8x256xf32, #tpu.memory_space<vmem>>) attributes {dimension_semantics = [#tpu.dimension_semantics<parallel>], iteration_bounds = array<i64: 2>, scalar_prefetch = 0 : i64, scratch_operands = 0 : i64, tpu.core_type = #tpu.core_type<tc>, window_params = [{transform_indices = @transform_0, window_bounds = array<i64: 8, 256>}, {pipeline_mode = #tpu.pipeline_mode<synchronous>, transform_indices = @transform_1, window_bounds = array<i64: 256, 768>}, {pipeline_mode = #tpu.pipeline_mode<synchronous>, transform_indices = @transform_2, window_bounds = array<i64: 1, 768>}, {pipeline_mode = #tpu.pipeline_mode<synchronous>, transform_indices = @transform_3, window_bounds = array<i64: 8, 128>}, {pipeline_mode = #tpu.pipeline_mode<synchronous>, transform_indices = @transform_4, window_bounds = array<i64: 8, 128>}, {pipeline_mode = #tpu.pipeline_mode<synchronous>, transform_indices = @transform_5, window_bounds = array<i64: 8, 128>}, {pipeline_mode = #tpu.pipeline_mode<synchronous>, transform_indices = @transform_6, window_bounds = array<i64: 8, 128>}, {transform_indices = @transform_7, window_bounds = array<i64: 1, 1, 8>}, {transform_indices = @transform_8, window_bounds = array<i64: 8, 256>}]} {
    %c0 = arith.constant 0 : index
    %c0_0 = arith.constant 0 : index
    %0 = vector.load %arg1[%c0, %c0_0] : memref<8x256xf32, #tpu.memory_space<vmem>>, vector<8x256xf32>
    %c0_1 = arith.constant 0 : index
    %c0_2 = arith.constant 0 : index
    %1 = vector.load %arg2[%c0_1, %c0_2] : memref<256x768xf32, #tpu.memory_space<vmem>>, vector<256x768xf32>
    %cst = arith.constant dense<0.000000e+00> : vector<8x768xf32>
    %2 = tpu.matmul %0, %1, %cst {dimension_numbers = #tpu.dot_dimension_numbers<[1], [0], [0], [1], [0, 0, 1, 1], [], []>} : vector<8x256xf32>, vector<256x768xf32>, vector<8x768xf32> -> vector<8x768xf32>
    %c0_3 = arith.constant 0 : index
    %c0_4 = arith.constant 0 : index
    %3 = vector.load %arg3[%c0_3, %c0_4] : memref<1x768xf32, #tpu.memory_space<vmem>>, vector<1x768xf32>
    %4 = vector.broadcast %3 : vector<1x768xf32> to vector<8x768xf32>
    %5 = arith.addf %2, %4 : vector<8x768xf32>
    %c0_5 = arith.constant 0 : index
    %c0_6 = arith.constant 0 : index
    %c0_7 = arith.constant 0 : index
    %6 = vector.load %arg8[%c0_5, %c0_6, %c0_7] : memref<1x1x8xf32, #tpu.memory_space<vmem>>, vector<1x1x8xf32>
    %7 = vector.shape_cast %6 : vector<1x1x8xf32> to vector<1x8xf32>
    %c0_8 = arith.constant 0 : index
    %c0_9 = arith.constant 0 : index
    %8 = vector.load %arg4[%c0_8, %c0_9] : memref<8x128xf32, #tpu.memory_space<vmem>>, vector<8x128xf32>
    %c0_10 = arith.constant 0 : index
    %c0_11 = arith.constant 0 : index
    %9 = vector.load %arg5[%c0_10, %c0_11] : memref<8x128xf32, #tpu.memory_space<vmem>>, vector<8x128xf32>
    %c0_12 = arith.constant 0 : index
    %c0_13 = arith.constant 0 : index
    %10 = vector.load %arg6[%c0_12, %c0_13] : memref<8x128xf32, #tpu.memory_space<vmem>>, vector<8x128xf32>
    %c0_14 = arith.constant 0 : index
    %c0_15 = arith.constant 0 : index
    %11 = vector.load %arg7[%c0_14, %c0_15] : memref<8x128xf32, #tpu.memory_space<vmem>>, vector<8x128xf32>
    %12 = vector.extract_strided_slice %5 {offsets = [0, 0], sizes = [8, 128], strides = [1, 1]} : vector<8x768xf32> to vector<8x128xf32>
    %13 = vector.extract_strided_slice %5 {offsets = [0, 256], sizes = [8, 128], strides = [1, 1]} : vector<8x768xf32> to vector<8x128xf32>
    %14 = vector.extract_strided_slice %5 {offsets = [0, 512], sizes = [8, 128], strides = [1, 1]} : vector<8x768xf32> to vector<8x128xf32>
    %15 = arith.mulf %12, %8 : vector<8x128xf32>
    %c64_i32 = arith.constant 64 : i32
    %16 = tpu.dynamic_rotate %12 by %c64_i32 dim 1 : vector<8x128xf32>, i32 -> vector<8x128xf32>
    %17 = arith.mulf %16, %9 : vector<8x128xf32>
    %18 = arith.addf %15, %17 : vector<8x128xf32>
    %19 = arith.mulf %13, %10 : vector<8x128xf32>
    %c64_i32_16 = arith.constant 64 : i32
    %20 = tpu.dynamic_rotate %13 by %c64_i32_16 dim 1 : vector<8x128xf32>, i32 -> vector<8x128xf32>
    %21 = arith.mulf %20, %11 : vector<8x128xf32>
    %22 = arith.addf %19, %21 : vector<8x128xf32>
    %cst_17 = arith.constant dense<0.000000e+00> : vector<8x8xf32>
    %23 = tpu.matmul %18, %22, %cst_17 {dimension_numbers = #tpu.dot_dimension_numbers<[1], [1], [0], [0], [0, 0, 1, 0], [], []>} : vector<8x128xf32>, vector<8x128xf32>, vector<8x8xf32> -> vector<8x8xf32>
    %24 = vector.broadcast %7 : vector<1x8xf32> to vector<8x8xf32>
    %25 = arith.addf %23, %24 : vector<8x8xf32>
    %cst_18 = arith.constant dense<0xFF800000> : vector<8xf32>
    %26 = vector.multi_reduction <maximumf>, %25, %cst_18 [1] : vector<8x8xf32> to vector<8xf32>
    %27 = vector.shape_cast %26 : vector<8xf32> to vector<8x1xf32>
    %28 = vector.broadcast %27 : vector<8x1xf32> to vector<8x8xf32>
    %29 = arith.subf %25, %28 : vector<8x8xf32>
    %30 = math.exp %29 : vector<8x8xf32>
    %cst_19 = arith.constant dense<0.000000e+00> : vector<8xf32>
    %31 = vector.multi_reduction <add>, %30, %cst_19 [1] : vector<8x8xf32> to vector<8xf32>
    %32 = vector.shape_cast %31 : vector<8xf32> to vector<8x1xf32>
    %33 = tpu.reciprocal %32 {approx = true} : vector<8x1xf32> -> vector<8x1xf32>
    %34 = vector.broadcast %33 : vector<8x1xf32> to vector<8x8xf32>
    %35 = arith.mulf %30, %34 : vector<8x8xf32>
    %cst_20 = arith.constant dense<0.000000e+00> : vector<8x128xf32>
    %36 = tpu.matmul %35, %14, %cst_20 {dimension_numbers = #tpu.dot_dimension_numbers<[1], [0], [0], [1], [0, 0, 1, 1], [], []>} : vector<8x8xf32>, vector<8x128xf32>, vector<8x128xf32> -> vector<8x128xf32>
    %c0_21 = arith.constant 0 : index
    %c0_22 = arith.constant 0 : index
    %37 = vector.load %arg9[%c0_21, %c0_22] : memref<8x256xf32, #tpu.memory_space<vmem>>, vector<8x128xf32>
    tpu.vector_store %arg9[%c0_21, %c0_22], %36 {strides = array<i32>} : memref<8x256xf32, #tpu.memory_space<vmem>>, vector<8x128xf32>,
    %38 = vector.extract_strided_slice %5 {offsets = [0, 128], sizes = [8, 128], strides = [1, 1]} : vector<8x768xf32> to vector<8x128xf32>
    %39 = vector.extract_strided_slice %5 {offsets = [0, 384], sizes = [8, 128], strides = [1, 1]} : vector<8x768xf32> to vector<8x128xf32>
    %40 = vector.extract_strided_slice %5 {offsets = [0, 640], sizes = [8, 128], strides = [1, 1]} : vector<8x768xf32> to vector<8x128xf32>
    %41 = arith.mulf %38, %8 : vector<8x128xf32>
    %c64_i32_23 = arith.constant 64 : i32
    %42 = tpu.dynamic_rotate %38 by %c64_i32_23 dim 1 : vector<8x128xf32>, i32 -> vector<8x128xf32>
    %43 = arith.mulf %42, %9 : vector<8x128xf32>
    %44 = arith.addf %41, %43 : vector<8x128xf32>
    %45 = arith.mulf %39, %10 : vector<8x128xf32>
    %c64_i32_24 = arith.constant 64 : i32
    %46 = tpu.dynamic_rotate %39 by %c64_i32_24 dim 1 : vector<8x128xf32>, i32 -> vector<8x128xf32>
    %47 = arith.mulf %46, %11 : vector<8x128xf32>
    %48 = arith.addf %45, %47 : vector<8x128xf32>
    %cst_25 = arith.constant dense<0.000000e+00> : vector<8x8xf32>
    %49 = tpu.matmul %44, %48, %cst_25 {dimension_numbers = #tpu.dot_dimension_numbers<[1], [1], [0], [0], [0, 0, 1, 0], [], []>} : vector<8x128xf32>, vector<8x128xf32>, vector<8x8xf32> -> vector<8x8xf32>
    %50 = vector.broadcast %7 : vector<1x8xf32> to vector<8x8xf32>
    %51 = arith.addf %49, %50 : vector<8x8xf32>
    %cst_26 = arith.constant dense<0xFF800000> : vector<8xf32>
    %52 = vector.multi_reduction <maximumf>, %51, %cst_26 [1] : vector<8x8xf32> to vector<8xf32>
    %53 = vector.shape_cast %52 : vector<8xf32> to vector<8x1xf32>
    %54 = vector.broadcast %53 : vector<8x1xf32> to vector<8x8xf32>
    %55 = arith.subf %51, %54 : vector<8x8xf32>
    %56 = math.exp %55 : vector<8x8xf32>
    %cst_27 = arith.constant dense<0.000000e+00> : vector<8xf32>
    %57 = vector.multi_reduction <add>, %56, %cst_27 [1] : vector<8x8xf32> to vector<8xf32>
    %58 = vector.shape_cast %57 : vector<8xf32> to vector<8x1xf32>
    %59 = tpu.reciprocal %58 {approx = true} : vector<8x1xf32> -> vector<8x1xf32>
    %60 = vector.broadcast %59 : vector<8x1xf32> to vector<8x8xf32>
    %61 = arith.mulf %56, %60 : vector<8x8xf32>
    %cst_28 = arith.constant dense<0.000000e+00> : vector<8x128xf32>
    %62 = tpu.matmul %61, %40, %cst_28 {dimension_numbers = #tpu.dot_dimension_numbers<[1], [0], [0], [1], [0, 0, 1, 1], [], []>} : vector<8x8xf32>, vector<8x128xf32>, vector<8x128xf32> -> vector<8x128xf32>
    %c0_29 = arith.constant 0 : index
    %c128 = arith.constant 128 : index
    %63 = vector.load %arg9[%c0_29, %c128] : memref<8x256xf32, #tpu.memory_space<vmem>>, vector<8x128xf32>
    tpu.vector_store %arg9[%c0_29, %c128], %62 {strides = array<i32>} : memref<8x256xf32, #tpu.memory_space<vmem>>, vector<8x128xf32>,
    return
  }
  func.func @transform_0(%arg0: i32) -> (i32, i32) {
    %c0_i32 = arith.constant 0 : i32
    %c0_i32_0 = arith.constant 0 : i32
    return %arg0, %c0_i32 : i32, i32
  }
  func.func @transform_1(%arg0: i32) -> (i32, i32) {
    %c0_i32 = arith.constant 0 : i32
    %c0_i32_0 = arith.constant 0 : i32
    %c0_i32_1 = arith.constant 0 : i32
    return %c0_i32, %c0_i32_0 : i32, i32
  }
  func.func @transform_2(%arg0: i32) -> (i32, i32) {
    %c0_i32 = arith.constant 0 : i32
    %c0_i32_0 = arith.constant 0 : i32
    %c0_i32_1 = arith.constant 0 : i32
    return %c0_i32, %c0_i32_0 : i32, i32
  }
  func.func @transform_3(%arg0: i32) -> (i32, i32) {
    %c0_i32 = arith.constant 0 : i32
    %c0_i32_0 = arith.constant 0 : i32
    %c0_i32_1 = arith.constant 0 : i32
    return %c0_i32, %c0_i32_0 : i32, i32
  }
  func.func @transform_4(%arg0: i32) -> (i32, i32) {
    %c0_i32 = arith.constant 0 : i32
    %c0_i32_0 = arith.constant 0 : i32
    %c0_i32_1 = arith.constant 0 : i32
    return %c0_i32, %c0_i32_0 : i32, i32
  }
  func.func @transform_5(%arg0: i32) -> (i32, i32) {
    %c0_i32 = arith.constant 0 : i32
    %c0_i32_0 = arith.constant 0 : i32
    %c0_i32_1 = arith.constant 0 : i32
    return %c0_i32, %c0_i32_0 : i32, i32
  }
  func.func @transform_6(%arg0: i32) -> (i32, i32) {
    %c0_i32 = arith.constant 0 : i32
    %c0_i32_0 = arith.constant 0 : i32
    %c0_i32_1 = arith.constant 0 : i32
    return %c0_i32, %c0_i32_0 : i32, i32
  }
  func.func @transform_7(%arg0: i32) -> (i32, i32, i32) {
    %c0_i32 = arith.constant 0 : i32
    %c0_i32_0 = arith.constant 0 : i32
    %c0_i32_1 = arith.constant 0 : i32
    return %arg0, %c0_i32, %c0_i32_0 : i32, i32, i32
  }
  func.func @transform_8(%arg0: i32) -> (i32, i32) {
    %c0_i32 = arith.constant 0 : i32
    %c0_i32_0 = arith.constant 0 : i32
    return %arg0, %c0_i32 : i32, i32
  }
}

</mosaic_0001>

<llo_original>
// kernel: tpu_custom_call.1
$region0: #{tpu_custom_call.1}
  #allocation0 [shape = 'u32[]', space=smem, size = 0x4, offset = 0x4, fixed_abs, tag = 'smem constant byte address 0x4 - core index']
  #allocation1 [shape = 'u32[144,128]{1,0:T(1,128)}', space=vmem, size = 0x12000, scoped, tag = 'internal scratch']
  %s0 = inlined_call_operand.hbm [shape: f32[16,256], index: 0, kind: input, shape index: {}]
  %s1 = inlined_call_operand.hbm [shape: f32[256,768], index: 1, kind: input, shape index: {}]
  %s2 = inlined_call_operand.hbm [shape: f32[1,768], index: 2, kind: input, shape index: {}]
  %s3 = inlined_call_operand.vmem [shape: f32[8,128], index: 3, kind: input, shape index: {}]
  %s4 = inlined_call_operand.hbm [shape: f32[8,128], index: 4, kind: input, shape index: {}]
  %s5 = inlined_call_operand.vmem [shape: f32[8,128], index: 5, kind: input, shape index: {}]
  %s6 = inlined_call_operand.hbm [shape: f32[8,128], index: 6, kind: input, shape index: {}]
  %s7 = inlined_call_operand.vmem [shape: f32[2,1,8], index: 7, kind: input, shape index: {}]
  %s8 = inlined_call_operand.hbm [shape: f32[16,256], index: 8, kind: output, shape index: {}]
  %s9 = sld [smem:[#allocation0]]
  $region85: #{tpu_custom_call.1} parent=0
    _
  %s11 = ssub.s32 1, %s9
  %s12 = scalar_select 0, %s11, %s9
  $region1: #{tpu_custom_call.1} parent=0
    #allocation2 [shape = 'u8[16384]{0}', space=vmem, size = 0x4000, scoped, tag = 'input window, operand 0']
    #allocation3 [shape = 's32[2]{0}', space=sflag, size = 0x8, scoped, tag = 'scoped memory for tpu_custom_call.1']
    #allocation4 [shape = 's32[2]{0}', space=sflag, size = 0x8, scoped, tag = 'scoped memory for tpu_custom_call.1']
    #allocation5 [shape = 'u8[786432]{0}', space=vmem, size = 0xc0000, scoped, tag = 'input window, operand 1, single buffered']
    #allocation6 [shape = 's32[1]{0}', space=sflag, size = 0x4, scoped, tag = 'scoped memory for tpu_custom_call.1']
    #allocation7 [shape = 'u8[3072]{0}', space=vmem, size = 0xc00, scoped, tag = 'input window, operand 2, single buffered']
    #allocation8 [shape = 'u8[4096]{0}', space=vmem, size = 0x1000, scoped, tag = 'input window, operand 4, single buffered']
    #allocation9 [shape = 's32[1]{0}', space=sflag, size = 0x4, scoped, tag = 'scoped memory for tpu_custom_call.1']
    #allocation10 [shape = 'u8[4096]{0}', space=vmem, size = 0x1000, scoped, tag = 'input window, operand 6, single buffered']
    #allocation11 [shape = 'u8[16384]{0}', space=vmem, size = 0x4000, scoped, tag = 'output window, operand 0']
    %13 = vsyncpa [#allocation3], 0
    %s14 = scalar_lea.sflag [#allocation3], 1
    %15 = vsyncpa %s14, 0
    %16 = vsyncpa [#allocation6], 0
    %17 = vsyncpa [#allocation9], 0
    %18 = vsyncpa [#allocation4], 0
    %s19 = scalar_lea.sflag [#allocation4], 1
    %20 = vsyncpa %s19, 0
    loop: start=0, step=1, limit=4
    $region2: #{tpu_custom_call.1} parent=1 // loop_pre_header
      _
    $region3: #{tpu_custom_call.1} parent=1 // loop_header
      %s22 = sphi 0, %s26
      %p23 = scmp.ge.s32.totalorder %s22, 4
      %s32 = sphi 0, %s34
      %s35 = sphi 0, %s32
      %s36 = sphi 0, %s35
      %s52 = sphi 0, %s36
      %s56 = sphi 0, %s56
      %s58 = sphi 0, %s56
      %s59 = sphi 0, %s58
      %s73 = sphi 0, %s59
      %s77 = sphi 0, %s77
      %s79 = sphi 0, %s77
      %s80 = sphi 0, %s79
      %s94 = sphi 0, %s80
      %s98 = sphi 0, %s98
      %s100 = sphi 0, %s98
      %s101 = sphi 0, %s100
      %s115 = sphi 0, %s101
      %s119 = sphi 0, %s119
      %s121 = sphi 0, %s119
      %s122 = sphi 0, %s121
      %s136 = sphi 0, %s122
      %s140 = sphi 0, %s140
      %s142 = sphi 0, %s140
      %s143 = sphi 0, %s142
      %s157 = sphi 0, %s143
      %s161 = sphi 0, %s161
      %s163 = sphi 0, %s161
      %s164 = sphi 0, %s163
      %s178 = sphi 0, %s164
      %s184 = sphi 0, %s186
      %s187 = sphi 0, %s184
      %s188 = sphi 0, %s187
      %s204 = sphi 0, %s188
      %s210 = sphi 0, %s212
      %s213 = sphi 0, %s210
      %s214 = sphi 0, %s213
      %s230 = sphi 0, %s214
    $region4: #{tpu_custom_call.1} parent=1 // loop_header_branch
      %25 = sbr.rel (%p23) target = $region8
    $region5: #{tpu_custom_call.1} parent=1 // loop_body
      %s27 = ssub.s32 %s22, 1
      %s28 = ssub.s32 %s22, 2
      %s29 = sadd.s32 %s22, 1
      %s30 = ssub.s32 %s22, %s29
      %p31 = scmp.eq.s32.totalorder %s30, 0
      %s33 = sadd.s32 %s32, 1
      %s34 = scalar_select %p31, %s32, %s33
      %p37 = pneg %p31
      %p38 = scmp.eq.s32.totalorder %s22, 1
      %p39 = por %p37, %p38
      %p40 = scmp.ne.s32.totalorder %s32, %s35
      %p41 = scmp.eq.s32.totalorder %s22, 0
      %p42 = por %p40, %p41
      %p43 = scmp.ne.s32.totalorder %s32, %s35
      %p44 = scmp.eq.s32.totalorder %s27, 1
      %p45 = por %p43, %p44
      %p46 = scmp.ne.s32.totalorder %s35, %s36
      %p47 = scmp.eq.s32.totalorder %s27, 0
      %p48 = por %p46, %p47
      %p49 = scmp.ne.s32.totalorder %s35, %s36
      %p50 = scmp.eq.s32.totalorder %s28, 1
      %p51 = por %p49, %p50
      %p53 = scmp.ne.s32.totalorder %s36, %s52
      %p54 = scmp.eq.s32.totalorder %s28, 0
      %p55 = por %p53, %p54
      %s57 = sadd.s32 %s56, 1
      %p60 = scmp.eq.s32.totalorder %s22, 1
      %p61 = scmp.ne.s32.totalorder %s56, %s58
      %p62 = scmp.eq.s32.totalorder %s22, 0
      %p63 = por %p61, %p62
      %p64 = scmp.ne.s32.totalorder %s56, %s58
      %p65 = scmp.eq.s32.totalorder %s27, 1
      %p66 = por %p64, %p65
      %p67 = scmp.ne.s32.totalorder %s58, %s59
      %p68 = scmp.eq.s32.totalorder %s27, 0
      %p69 = por %p67, %p68
      %p70 = scmp.ne.s32.totalorder %s58, %s59
      %p71 = scmp.eq.s32.totalorder %s28, 1
      %p72 = por %p70, %p71
      %p74 = scmp.ne.s32.totalorder %s59, %s73
      %p75 = scmp.eq.s32.totalorder %s28, 0
      %p76 = por %p74, %p75
      %s78 = sadd.s32 %s77, 1
      %p81 = scmp.eq.s32.totalorder %s22, 1
      %p82 = scmp.ne.s32.totalorder %s77, %s79
      %p83 = scmp.eq.s32.totalorder %s22, 0
      %p84 = por %p82, %p83
      %p85 = scmp.ne.s32.totalorder %s77, %s79
      %p86 = scmp.eq.s32.totalorder %s27, 1
      %p87 = por %p85, %p86
      %p88 = scmp.ne.s32.totalorder %s79, %s80
      %p89 = scmp.eq.s32.totalorder %s27, 0
      %p90 = por %p88, %p89
      %p91 = scmp.ne.s32.totalorder %s79, %s80
      %p92 = scmp.eq.s32.totalorder %s28, 1
      %p93 = por %p91, %p92
      %p95 = scmp.ne.s32.totalorder %s80, %s94
      %p96 = scmp.eq.s32.totalorder %s28, 0
      %p97 = por %p95, %p96
      %s99 = sadd.s32 %s98, 1
      %p102 = scmp.eq.s32.totalorder %s22, 1
      %p103 = scmp.ne.s32.totalorder %s98, %s100
      %p104 = scmp.eq.s32.totalorder %s22, 0
      %p105 = por %p103, %p104
      %p106 = scmp.ne.s32.totalorder %s98, %s100
      %p107 = scmp.eq.s32.totalorder %s27, 1
      %p108 = por %p106, %p107
      %p109 = scmp.ne.s32.totalorder %s100, %s101
      %p110 = scmp.eq.s32.totalorder %s27, 0
      %p111 = por %p109, %p110
      %p112 = scmp.ne.s32.totalorder %s100, %s101
      %p113 = scmp.eq.s32.totalorder %s28, 1
      %p114 = por %p112, %p113
      %p116 = scmp.ne.s32.totalorder %s101, %s115
      %p117 = scmp.eq.s32.totalorder %s28, 0
      %p118 = por %p116, %p117
      %s120 = sadd.s32 %s119, 1
      %p123 = scmp.eq.s32.totalorder %s22, 1
      %p124 = scmp.ne.s32.totalorder %s119, %s121
      %p125 = scmp.eq.s32.totalorder %s22, 0
      %p126 = por %p124, %p125
      %p127 = scmp.ne.s32.totalorder %s119, %s121
      %p128 = scmp.eq.s32.totalorder %s27, 1
      %p129 = por %p127, %p128
      %p130 = scmp.ne.s32.totalorder %s121, %s122
      %p131 = scmp.eq.s32.totalorder %s27, 0
      %p132 = por %p130, %p131
      %p133 = scmp.ne.s32.totalorder %s121, %s122
      %p134 = scmp.eq.s32.totalorder %s28, 1
      %p135 = por %p133, %p134
      %p137 = scmp.ne.s32.totalorder %s122, %s136
      %p138 = scmp.eq.s32.totalorder %s28, 0
      %p139 = por %p137, %p138
      %s141 = sadd.s32 %s140, 1
      %p144 = scmp.eq.s32.totalorder %s22, 1
      %p145 = scmp.ne.s32.totalorder %s140, %s142
      %p146 = scmp.eq.s32.totalorder %s22, 0
      %p147 = por %p145, %p146
      %p148 = scmp.ne.s32.totalorder %s140, %s142
      %p149 = scmp.eq.s32.totalorder %s27, 1
      %p150 = por %p148, %p149
      %p151 = scmp.ne.s32.totalorder %s142, %s143
      %p152 = scmp.eq.s32.totalorder %s27, 0
      %p153 = por %p151, %p152
      %p154 = scmp.ne.s32.totalorder %s142, %s143
      %p155 = scmp.eq.s32.totalorder %s28, 1
      %p156 = por %p154, %p155
      %p158 = scmp.ne.s32.totalorder %s143, %s157
      %p159 = scmp.eq.s32.totalorder %s28, 0
      %p160 = por %p158, %p159
      %s162 = sadd.s32 %s161, 1
      %p165 = scmp.eq.s32.totalorder %s22, 1
      %p166 = scmp.ne.s32.totalorder %s161, %s163
      %p167 = scmp.eq.s32.totalorder %s22, 0
      %p168 = por %p166, %p167
      %p169 = scmp.ne.s32.totalorder %s161, %s163
      %p170 = scmp.eq.s32.totalorder %s27, 1
      %p171 = por %p169, %p170
      %p172 = scmp.ne.s32.totalorder %s163, %s164
      %p173 = scmp.eq.s32.totalorder %s27, 0
      %p174 = por %p172, %p173
      %p175 = scmp.ne.s32.totalorder %s163, %s164
      %p176 = scmp.eq.s32.totalorder %s28, 1
      %p177 = por %p175, %p176
      %p179 = scmp.ne.s32.totalorder %s164, %s178
      %p180 = scmp.eq.s32.totalorder %s28, 0
      %p181 = por %p179, %p180
      %s182 = ssub.s32 %s22, %s29
      %p183 = scmp.eq.s32.totalorder %s182, 0
      %s185 = sadd.s32 %s184, 1
      %s186 = scalar_select %p183, %s184, %s185
      %p189 = pneg %p183
      %p190 = scmp.eq.s32.totalorder %s22, 1
      %p191 = por %p189, %p190
      %p192 = scmp.ne.s32.totalorder %s184, %s187
      %p193 = scmp.eq.s32.totalorder %s22, 0
      %p194 = por %p192, %p193
      %p195 = scmp.ne.s32.totalorder %s184, %s187
      %p196 = scmp.eq.s32.totalorder %s27, 1
      %p197 = por %p195, %p196
      %p198 = scmp.ne.s32.totalorder %s187, %s188
      %p199 = scmp.eq.s32.totalorder %s27, 0
      %p200 = por %p198, %p199
      %p201 = scmp.ne.s32.totalorder %s187, %s188
      %p202 = scmp.eq.s32.totalorder %s28, 1
      %p203 = por %p201, %p202
      %p205 = scmp.ne.s32.totalorder %s188, %s204
      %p206 = scmp.eq.s32.totalorder %s28, 0
      %p207 = por %p205, %p206
      %s208 = ssub.s32 %s22, %s29
      %p209 = scmp.eq.s32.totalorder %s208, 0
      %s211 = sadd.s32 %s210, 1
      %s212 = scalar_select %p209, %s210, %s211
      %p215 = pneg %p209
      %p216 = scmp.eq.s32.totalorder %s22, 1
      %p217 = por %p215, %p216
      %p218 = scmp.ne.s32.totalorder %s210, %s213
      %p219 = scmp.eq.s32.totalorder %s22, 0
      %p220 = por %p218, %p219
      %p221 = scmp.ne.s32.totalorder %s210, %s213
      %p222 = scmp.eq.s32.totalorder %s27, 1
      %p223 = por %p221, %p222
      %p224 = scmp.ne.s32.totalorder %s213, %s214
      %p225 = scmp.eq.s32.totalorder %s27, 0
      %p226 = por %p224, %p225
      %p227 = scmp.ne.s32.totalorder %s213, %s214
      %p228 = scmp.eq.s32.totalorder %s28, 1
      %p229 = por %p227, %p228
      %p231 = scmp.ne.s32.totalorder %s214, %s230
      %p232 = scmp.eq.s32.totalorder %s28, 0
      %p233 = por %p231, %p232
      %p234 = scmp.le.s32.totalorder 1, %s22
      %p235 = scmp.lt.s32.totalorder %s22, 3
      %p236 = pnand %p234, %p235
      %p237 = pneg %p236
      // Predicated region
      $region9: #{tpu_custom_call.1} parent=5 // pred_check
        _
      $region10: #{tpu_custom_call.1} parent=5 // pred_check_branch
        %239 = sbr.rel (%p236) target = $region12
      $region11: #{tpu_custom_call.1} parent=5 // pred_region
        %s240 = ssub.s32 %s22, 1
        // Predicated region
        $region13: #{tpu_custom_call.1} parent=11 // pred_check
          %p241 = pneg %p69
        $region14: #{tpu_custom_call.1} parent=11 // pred_check_branch
          %243 = sbr.rel (%p241) target = $region16
        $region15: #{tpu_custom_call.1} parent=11 // pred_region
          %s245 = ssub.s32 24576, 24576
          %246 = vsyncadd [#allocation6], %s245
          %s247 = sshll.u32 [#allocation5], 4
          %s248 = int_to_ptr.vmem [resolvable:$true] %s247
          %253 = dma.hbm_to_vmem [thread:$0]  %s1, 24576, %s248, [#allocation6], 768, 768, 48
        $region16: #{tpu_custom_call.1} parent=11 // pred_fallthru
          _
        // Predicated region
        $region17: #{tpu_custom_call.1} parent=11 // pred_check
          %p254 = pneg %p90
        $region18: #{tpu_custom_call.1} parent=11 // pred_check_branch
          %256 = sbr.rel (%p254) target = $region20
        $region19: #{tpu_custom_call.1} parent=11 // pred_region
          %s258 = ssub.s32 96, 96
          %259 = vsyncadd [#allocation6], %s258
          %s261 = sshll.u32 [#allocation7], 4
          %s262 = int_to_ptr.vmem [resolvable:$true] %s261
          %264 = dma.hbm_to_vmem [thread:$0]  %s2, 96, %s262, [#allocation6]
        $region20: #{tpu_custom_call.1} parent=11 // pred_fallthru
          _
        // Predicated region
        $region21: #{tpu_custom_call.1} parent=11 // pred_check
          %p265 = pneg %p111
        $region22: #{tpu_custom_call.1} parent=11 // pred_check_branch
          %267 = sbr.rel (%p265) target = $region24
        $region23: #{tpu_custom_call.1} parent=11 // pred_region
          _
        $region24: #{tpu_custom_call.1} parent=11 // pred_fallthru
          _
        // Predicated region
        $region25: #{tpu_custom_call.1} parent=11 // pred_check
          %p268 = pneg %p132
        $region26: #{tpu_custom_call.1} parent=11 // pred_check_branch
          %270 = sbr.rel (%p268) target = $region28
        $region27: #{tpu_custom_call.1} parent=11 // pred_region
          %s272 = ssub.s32 128, 128
          %273 = vsyncadd [#allocation9], %s272
          %s275 = sshll.u32 [#allocation8], 4
          %s276 = int_to_ptr.vmem [resolvable:$true] %s275
          %278 = dma.hbm_to_vmem [thread:$0]  %s4, 128, %s276, [#allocation9]
        $region28: #{tpu_custom_call.1} parent=11 // pred_fallthru
          _
        // Predicated region
        $region29: #{tpu_custom_call.1} parent=11 // pred_check
          %p279 = pneg %p153
        $region30: #{tpu_custom_call.1} parent=11 // pred_check_branch
          %281 = sbr.rel (%p279) target = $region32
        $region31: #{tpu_custom_call.1} parent=11 // pred_region
          _
        $region32: #{tpu_custom_call.1} parent=11 // pred_fallthru
          _
        // Predicated region
        $region33: #{tpu_custom_call.1} parent=11 // pred_check
          %p282 = pneg %p174
        $region34: #{tpu_custom_call.1} parent=11 // pred_check_branch
          %284 = sbr.rel (%p282) target = $region36
        $region35: #{tpu_custom_call.1} parent=11 // pred_region
          %s286 = ssub.s32 128, 128
          %287 = vsyncadd [#allocation9], %s286
          %s289 = sshll.u32 [#allocation10], 4
          %s290 = int_to_ptr.vmem [resolvable:$true] %s289
          %292 = dma.hbm_to_vmem [thread:$0]  %s6, 128, %s290, [#allocation9]
        $region36: #{tpu_custom_call.1} parent=11 // pred_fallthru
          _
      $region12: #{tpu_custom_call.1} parent=5 // pred_fallthru
        _
      %p293 = scmp.lt.s32.totalorder %s22, 2
      // Predicated region
      $region37: #{tpu_custom_call.1} parent=5 // pred_check
        %p294 = pneg %p293
      $region38: #{tpu_custom_call.1} parent=5 // pred_check_branch
        %296 = sbr.rel (%p294) target = $region40
      $region39: #{tpu_custom_call.1} parent=5 // pred_region
        // Predicated region
        $region41: #{tpu_custom_call.1} parent=39 // pred_check
          %p297 = pneg %p42
        $region42: #{tpu_custom_call.1} parent=39 // pred_check_branch
          %299 = sbr.rel (%p297) target = $region44
        $region43: #{tpu_custom_call.1} parent=39 // pred_region
          %s300 = sand.u32 %s32, 1
          %s301 = scalar_lea.sflag [#allocation3], %s300
          %s302 = sand.u32 %s32, 1
          %s303 = smul.addr %s302, 16
          %s304 = scalar_lea.vmem [#allocation2], %s303
          %s306 = ssub.s32 256, 256
          %307 = vsyncadd %s301, %s306
          %s308 = smul.addr %s22, 2
          %s309 = smul.addr %s308, 128
          %s310 = scalar_lea.hbm %s0, %s309
          %s312 = sshll.u32 %s304, 4
          %s313 = int_to_ptr.vmem [resolvable:$true] %s312
          %315 = dma.hbm_to_vmem [thread:$0]  %s310, 256, %s313, %s301
        $region44: #{tpu_custom_call.1} parent=39 // pred_fallthru
          _
        // Predicated region
        $region45: #{tpu_custom_call.1} parent=39 // pred_check
          %p316 = pneg %p194
        $region46: #{tpu_custom_call.1} parent=39 // pred_check_branch
          %318 = sbr.rel (%p316) target = $region48
        $region47: #{tpu_custom_call.1} parent=39 // pred_region
          %p319 = scmp.lt.s32.totalorder %s22, 1
          %s320 = scalar_select %p319, %s22, 1
          %s321 = scalar_lea.vmem %s7, %s320
        $region48: #{tpu_custom_call.1} parent=39 // pred_fallthru
          _
      $region40: #{tpu_custom_call.1} parent=5 // pred_fallthru
        _
      %p322 = scmp.le.s32.totalorder 1, %s22
      %p323 = scmp.lt.s32.totalorder %s22, 3
      %p324 = pnand %p322, %p323
      %p325 = pneg %p324
      // Predicated region
      $region49: #{tpu_custom_call.1} parent=5 // pred_check
        _
      $region50: #{tpu_custom_call.1} parent=5 // pred_check_branch
        %327 = sbr.rel (%p324) target = $region52
      $region51: #{tpu_custom_call.1} parent=5 // pred_region
        %s328 = ssub.s32 %s22, 1
        %s329 = sand.u32 %s35, 1
        %s330 = scalar_lea.sflag [#allocation3], %s329
        %s331 = sand.u32 %s35, 1
        %s332 = smul.addr %s331, 16
        %s333 = scalar_lea.vmem [#allocation2], %s332
        // Predicated region
        $region53: #{tpu_custom_call.1} parent=51 // pred_check
          %p334 = pneg %p48
        $region54: #{tpu_custom_call.1} parent=51 // pred_check_branch
          %336 = sbr.rel (%p334) target = $region56
        $region55: #{tpu_custom_call.1} parent=51 // pred_region
          %337 = dma.done %s330, 256
        $region56: #{tpu_custom_call.1} parent=51 // pred_fallthru
          _
        // Predicated region
        $region57: #{tpu_custom_call.1} parent=51 // pred_check
          %p338 = pneg %p69
        $region58: #{tpu_custom_call.1} parent=51 // pred_check_branch
          %340 = sbr.rel (%p338) target = $region60
        $region59: #{tpu_custom_call.1} parent=51 // pred_region
          %341 = dma.done [#allocation6], 24576
        $region60: #{tpu_custom_call.1} parent=51 // pred_fallthru
          _
        // Predicated region
        $region61: #{tpu_custom_call.1} parent=51 // pred_check
          %p342 = pneg %p90
        $region62: #{tpu_custom_call.1} parent=51 // pred_check_branch
          %344 = sbr.rel (%p342) target = $region64
        $region63: #{tpu_custom_call.1} parent=51 // pred_region
          %345 = dma.done [#allocation6], 96
        $region64: #{tpu_custom_call.1} parent=51 // pred_fallthru
          _
        // Predicated region
        $region65: #{tpu_custom_call.1} parent=51 // pred_check
          %p346 = pneg %p132
        $region66: #{tpu_custom_call.1} parent=51 // pred_check_branch
          %348 = sbr.rel (%p346) target = $region68
        $region67: #{tpu_custom_call.1} parent=51 // pred_region
          %349 = dma.done [#allocation9], 128
        $region68: #{tpu_custom_call.1} parent=51 // pred_fallthru
          _
        // Predicated region
        $region69: #{tpu_custom_call.1} parent=51 // pred_check
          %p350 = pneg %p174
        $region70: #{tpu_custom_call.1} parent=51 // pred_check_branch
          %352 = sbr.rel (%p350) target = $region72
        $region71: #{tpu_custom_call.1} parent=51 // pred_region
          %353 = dma.done [#allocation9], 128
        $region72: #{tpu_custom_call.1} parent=51 // pred_fallthru
          _
        %s354 = sand.u32 %s35, 1
        %s355 = scalar_lea.sflag [#allocation3], %s354
        %s356 = sand.u32 %s35, 1
        %s357 = smul.addr %s356, 16
        %s358 = scalar_lea.vmem [#allocation2], %s357
        %p359 = pneg %p48
        %p360 = pneg %p45
        %p361 = pneg %p69
        %p362 = pneg %p66
        %p363 = pneg %p90
        %p364 = pneg %p87
        %p365 = pneg %p111
        %p366 = pneg %p108
        %p367 = pneg %p132
        %p368 = pneg %p129
        %p369 = pneg %p153
        %p370 = pneg %p150
        %p371 = pneg %p174
        %p372 = pneg %p171
        %p373 = scmp.lt.s32.totalorder %s27, 1
        %s374 = scalar_select %p373, %s27, 1
        %s375 = scalar_lea.vmem %s7, %s374
        %p376 = pneg %p200
        %p377 = pneg %p197
        %p378 = pneg %p226
        %p379 = pneg %p223
        %s380 = sand.u32 %s213, 1
        %s381 = scalar_lea.sflag [#allocation4], %s380
        %s382 = sand.u32 %s213, 1
        %s383 = smul.addr %s382, 16
        %s384 = scalar_lea.vmem [#allocation11], %s383
        %p385 = scmp.lt.s32.totalorder %s27, 1
        %s386 = scalar_select %p385, %s27, 1
        %s387 = scalar_lea.vmem %s7, %s386
        %v388 = vld [vmem:[%s333] sm:$0xff]
        %v389 = vld [vmem:[%s333 + $0x8] sm:$0xff]
        %v390 = vld [vmem:[#allocation5] sm:$0xff]
        %v391 = vld [vmem:[#allocation5 + $0x8] sm:$0xff]
        %v392 = vld [vmem:[#allocation5 + $0x10] sm:$0xff]
        %v393 = vld [vmem:[#allocation5 + $0x18] sm:$0xff]
        %v394 = vld [vmem:[#allocation5 + $0x20] sm:$0xff]
        %v395 = vld [vmem:[#allocation5 + $0x28] sm:$0xff]
        %v396 = vld [vmem:[#allocation5 + $0x30] sm:$0xff]
        %v397 = vld [vmem:[#allocation5 + $0x38] sm:$0xff]
        %v398 = vld [vmem:[#allocation5 + $0x40] sm:$0xff]
        %v399 = vld [vmem:[#allocation5 + $0x48] sm:$0xff]
        %v400 = vld [vmem:[#allocation5 + $0x50] sm:$0xff]
        %v401 = vld [vmem:[#allocation5 + $0x58] sm:$0xff]
        %v402 = vld [vmem:[#allocation5 + $0x60] sm:$0xff]
        %v403 = vld [vmem:[#allocation5 + $0x68] sm:$0xff]
        %v404 = vld [vmem:[#allocation5 + $0x70] sm:$0xff]
        %v405 = vld [vmem:[#allocation5 + $0x78] sm:$0xff]
        %v406 = vld [vmem:[#allocation5 + $0x80] sm:$0xff]
        %v407 = vld [vmem:[#allocation5 + $0x88] sm:$0xff]
        %v408 = vld [vmem:[#allocation5 + $0x90] sm:$0xff]
        %v409 = vld [vmem:[#allocation5 + $0x98] sm:$0xff]
        %v410 = vld [vmem:[#allocation5 + $0xa0] sm:$0xff]
        %v411 = vld [vmem:[#allocation5 + $0xa8] sm:$0xff]
        %v412 = vld [vmem:[#allocation5 + $0xb0] sm:$0xff]
        %v413 = vld [vmem:[#allocation5 + $0xb8] sm:$0xff]
        %v414 = vld [vmem:[#allocation5 + $0xc0] sm:$0xff]
        %v415 = vld [vmem:[#allocation5 + $0xc8] sm:$0xff]
        %v416 = vld [vmem:[#allocation5 + $0xd0] sm:$0xff]
        %v417 = vld [vmem:[#allocation5 + $0xd8] sm:$0xff]
        %v418 = vld [vmem:[#allocation5 + $0xe0] sm:$0xff]
        %v419 = vld [vmem:[#allocation5 + $0xe8] sm:$0xff]
        %v420 = vld [vmem:[#allocation5 + $0xf0] sm:$0xff]
        %v421 = vld [vmem:[#allocation5 + $0xf8] sm:$0xff]
        %v422 = vld [vmem:[#allocation5 + $0x100] sm:$0xff]
        %v423 = vld [vmem:[#allocation5 + $0x108] sm:$0xff]
        %v424 = vld [vmem:[#allocation5 + $0x110] sm:$0xff]
        %v425 = vld [vmem:[#allocation5 + $0x118] sm:$0xff]
        %v426 = vld [vmem:[#allocation5 + $0x120] sm:$0xff]
        %v427 = vld [vmem:[#allocation5 + $0x128] sm:$0xff]
        %v428 = vld [vmem:[#allocation5 + $0x130] sm:$0xff]
        %v429 = vld [vmem:[#allocation5 + $0x138] sm:$0xff]
        %v430 = vld [vmem:[#allocation5 + $0x140] sm:$0xff]
        %v431 = vld [vmem:[#allocation5 + $0x148] sm:$0xff]
        %v432 = vld [vmem:[#allocation5 + $0x150] sm:$0xff]
        %v433 = vld [vmem:[#allocation5 + $0x158] sm:$0xff]
        %v434 = vld [vmem:[#allocation5 + $0x160] sm:$0xff]
        %v435 = vld [vmem:[#allocation5 + $0x168] sm:$0xff]
        %v436 = vld [vmem:[#allocation5 + $0x170] sm:$0xff]
        %v437 = vld [vmem:[#allocation5 + $0x178] sm:$0xff]
        %v438 = vld [vmem:[#allocation5 + $0x180] sm:$0xff]
        %v439 = vld [vmem:[#allocation5 + $0x188] sm:$0xff]
        %v440 = vld [vmem:[#allocation5 + $0x190] sm:$0xff]
        %v441 = vld [vmem:[#allocation5 + $0x198] sm:$0xff]
        %v442 = vld [vmem:[#allocation5 + $0x1a0] sm:$0xff]
        %v443 = vld [vmem:[#allocation5 + $0x1a8] sm:$0xff]
        %v444 = vld [vmem:[#allocation5 + $0x1b0] sm:$0xff]
        %v445 = vld [vmem:[#allocation5 + $0x1b8] sm:$0xff]
        %v446 = vld [vmem:[#allocation5 + $0x1c0] sm:$0xff]
        %v447 = vld [vmem:[#allocation5 + $0x1c8] sm:$0xff]
        %v448 = vld [vmem:[#allocation5 + $0x1d0] sm:$0xff]
        %v449 = vld [vmem:[#allocation5 + $0x1d8] sm:$0xff]
        %v450 = vld [vmem:[#allocation5 + $0x1e0] sm:$0xff]
        %v451 = vld [vmem:[#allocation5 + $0x1e8] sm:$0xff]
        %v452 = vld [vmem:[#allocation5 + $0x1f0] sm:$0xff]
        %v453 = vld [vmem:[#allocation5 + $0x1f8] sm:$0xff]
        %v454 = vld [vmem:[#allocation5 + $0x200] sm:$0xff]
        %v455 = vld [vmem:[#allocation5 + $0x208] sm:$0xff]
        %v456 = vld [vmem:[#allocation5 + $0x210] sm:$0xff]
        %v457 = vld [vmem:[#allocation5 + $0x218] sm:$0xff]
        %v458 = vld [vmem:[#allocation5 + $0x220] sm:$0xff]
        %v459 = vld [vmem:[#allocation5 + $0x228] sm:$0xff]
        %v460 = vld [vmem:[#allocation5 + $0x230] sm:$0xff]
        %v461 = vld [vmem:[#allocation5 + $0x238] sm:$0xff]
        %v462 = vld [vmem:[#allocation5 + $0x240] sm:$0xff]
        %v463 = vld [vmem:[#allocation5 + $0x248] sm:$0xff]
        %v464 = vld [vmem:[#allocation5 + $0x250] sm:$0xff]
        %v465 = vld [vmem:[#allocation5 + $0x258] sm:$0xff]
        %v466 = vld [vmem:[#allocation5 + $0x260] sm:$0xff]
        %v467 = vld [vmem:[#allocation5 + $0x268] sm:$0xff]
        %v468 = vld [vmem:[#allocation5 + $0x270] sm:$0xff]
        %v469 = vld [vmem:[#allocation5 + $0x278] sm:$0xff]
        %v470 = vld [vmem:[#allocation5 + $0x280] sm:$0xff]
        %v471 = vld [vmem:[#allocation5 + $0x288] sm:$0xff]
        %v472 = vld [vmem:[#allocation5 + $0x290] sm:$0xff]
        %v473 = vld [vmem:[#allocation5 + $0x298] sm:$0xff]
        %v474 = vld [vmem:[#allocation5 + $0x2a0] sm:$0xff]
        %v475 = vld [vmem:[#allocation5 + $0x2a8] sm:$0xff]
        %v476 = vld [vmem:[#allocation5 + $0x2b0] sm:$0xff]
        %v477 = vld [vmem:[#allocation5 + $0x2b8] sm:$0xff]
        %v478 = vld [vmem:[#allocation5 + $0x2c0] sm:$0xff]
        %v479 = vld [vmem:[#allocation5 + $0x2c8] sm:$0xff]
        %v480 = vld [vmem:[#allocation5 + $0x2d0] sm:$0xff]
        %v481 = vld [vmem:[#allocation5 + $0x2d8] sm:$0xff]
        %v482 = vld [vmem:[#allocation5 + $0x2e0] sm:$0xff]
        %v483 = vld [vmem:[#allocation5 + $0x2e8] sm:$0xff]
        %v484 = vld [vmem:[#allocation5 + $0x2f0] sm:$0xff]
        %v485 = vld [vmem:[#allocation5 + $0x2f8] sm:$0xff]
        %v486 = vld [vmem:[#allocation5 + $0x300] sm:$0xff]
        %v487 = vld [vmem:[#allocation5 + $0x308] sm:$0xff]
        %v488 = vld [vmem:[#allocation5 + $0x310] sm:$0xff]
        %v489 = vld [vmem:[#allocation5 + $0x318] sm:$0xff]
        %v490 = vld [vmem:[#allocation5 + $0x320] sm:$0xff]
        %v491 = vld [vmem:[#allocation5 + $0x328] sm:$0xff]
        %v492 = vld [vmem:[#allocation5 + $0x330] sm:$0xff]
        %v493 = vld [vmem:[#allocation5 + $0x338] sm:$0xff]
        %v494 = vld [vmem:[#allocation5 + $0x340] sm:$0xff]
        %v495 = vld [vmem:[#allocation5 + $0x348] sm:$0xff]
        %v496 = vld [vmem:[#allocation5 + $0x350] sm:$0xff]
        %v497 = vld [vmem:[#allocation5 + $0x358] sm:$0xff]
        %v498 = vld [vmem:[#allocation5 + $0x360] sm:$0xff]
        %v499 = vld [vmem:[#allocation5 + $0x368] sm:$0xff]
        %v500 = vld [vmem:[#allocation5 + $0x370] sm:$0xff]
        %v501 = vld [vmem:[#allocation5 + $0x378] sm:$0xff]
        %v502 = vld [vmem:[#allocation5 + $0x380] sm:$0xff]
        %v503 = vld [vmem:[#allocation5 + $0x388] sm:$0xff]
        %v504 = vld [vmem:[#allocation5 + $0x390] sm:$0xff]
        %v505 = vld [vmem:[#allocation5 + $0x398] sm:$0xff]
        %v506 = vld [vmem:[#allocation5 + $0x3a0] sm:$0xff]
        %v507 = vld [vmem:[#allocation5 + $0x3a8] sm:$0xff]
        %v508 = vld [vmem:[#allocation5 + $0x3b0] sm:$0xff]
        %v509 = vld [vmem:[#allocation5 + $0x3b8] sm:$0xff]
        %v510 = vld [vmem:[#allocation5 + $0x3c0] sm:$0xff]
        %v511 = vld [vmem:[#allocation5 + $0x3c8] sm:$0xff]
        %v512 = vld [vmem:[#allocation5 + $0x3d0] sm:$0xff]
        %v513 = vld [vmem:[#allocation5 + $0x3d8] sm:$0xff]
        %v514 = vld [vmem:[#allocation5 + $0x3e0] sm:$0xff]
        %v515 = vld [vmem:[#allocation5 + $0x3e8] sm:$0xff]
        %v516 = vld [vmem:[#allocation5 + $0x3f0] sm:$0xff]
        %v517 = vld [vmem:[#allocation5 + $0x3f8] sm:$0xff]
        %v518 = vld [vmem:[#allocation5 + $0x400] sm:$0xff]
        %v519 = vld [vmem:[#allocation5 + $0x408] sm:$0xff]
        %v520 = vld [vmem:[#allocation5 + $0x410] sm:$0xff]
        %v521 = vld [vmem:[#allocation5 + $0x418] sm:$0xff]
        %v522 = vld [vmem:[#allocation5 + $0x420] sm:$0xff]
        %v523 = vld [vmem:[#allocation5 + $0x428] sm:$0xff]
        %v524 = vld [vmem:[#allocation5 + $0x430] sm:$0xff]
        %v525 = vld [vmem:[#allocation5 + $0x438] sm:$0xff]
        %v526 = vld [vmem:[#allocation5 + $0x440] sm:$0xff]
        %v527 = vld [vmem:[#allocation5 + $0x448] sm:$0xff]
        %v528 = vld [vmem:[#allocation5 + $0x450] sm:$0xff]
        %v529 = vld [vmem:[#allocation5 + $0x458] sm:$0xff]
        %v530 = vld [vmem:[#allocation5 + $0x460] sm:$0xff]
        %v531 = vld [vmem:[#allocation5 + $0x468] sm:$0xff]
        %v532 = vld [vmem:[#allocation5 + $0x470] sm:$0xff]
        %v533 = vld [vmem:[#allocation5 + $0x478] sm:$0xff]
        %v534 = vld [vmem:[#allocation5 + $0x480] sm:$0xff]
        %v535 = vld [vmem:[#allocation5 + $0x488] sm:$0xff]
        %v536 = vld [vmem:[#allocation5 + $0x490] sm:$0xff]
        %v537 = vld [vmem:[#allocation5 + $0x498] sm:$0xff]
        %v538 = vld [vmem:[#allocation5 + $0x4a0] sm:$0xff]
        %v539 = vld [vmem:[#allocation5 + $0x4a8] sm:$0xff]
        %v540 = vld [vmem:[#allocation5 + $0x4b0] sm:$0xff]
        %v541 = vld [vmem:[#allocation5 + $0x4b8] sm:$0xff]
        %v542 = vld [vmem:[#allocation5 + $0x4c0] sm:$0xff]
        %v543 = vld [vmem:[#allocation5 + $0x4c8] sm:$0xff]
        %v544 = vld [vmem:[#allocation5 + $0x4d0] sm:$0xff]
        %v545 = vld [vmem:[#allocation5 + $0x4d8] sm:$0xff]
        %v546 = vld [vmem:[#allocation5 + $0x4e0] sm:$0xff]
        %v547 = vld [vmem:[#allocation5 + $0x4e8] sm:$0xff]
        %v548 = vld [vmem:[#allocation5 + $0x4f0] sm:$0xff]
        %v549 = vld [vmem:[#allocation5 + $0x4f8] sm:$0xff]
        %v550 = vld [vmem:[#allocation5 + $0x500] sm:$0xff]
        %v551 = vld [vmem:[#allocation5 + $0x508] sm:$0xff]
        %v552 = vld [vmem:[#allocation5 + $0x510] sm:$0xff]
        %v553 = vld [vmem:[#allocation5 + $0x518] sm:$0xff]
        %v554 = vld [vmem:[#allocation5 + $0x520] sm:$0xff]
        %v555 = vld [vmem:[#allocation5 + $0x528] sm:$0xff]
        %v556 = vld [vmem:[#allocation5 + $0x530] sm:$0xff]
        %v557 = vld [vmem:[#allocation5 + $0x538] sm:$0xff]
        %v558 = vld [vmem:[#allocation5 + $0x540] sm:$0xff]
        %v559 = vld [vmem:[#allocation5 + $0x548] sm:$0xff]
        %v560 = vld [vmem:[#allocation5 + $0x550] sm:$0xff]
        %v561 = vld [vmem:[#allocation5 + $0x558] sm:$0xff]
        %v562 = vld [vmem:[#allocation5 + $0x560] sm:$0xff]
        %v563 = vld [vmem:[#allocation5 + $0x568] sm:$0xff]
        %v564 = vld [vmem:[#allocation5 + $0x570] sm:$0xff]
        %v565 = vld [vmem:[#allocation5 + $0x578] sm:$0xff]
        %v566 = vld [vmem:[#allocation5 + $0x580] sm:$0xff]
        %v567 = vld [vmem:[#allocation5 + $0x588] sm:$0xff]
        %v568 = vld [vmem:[#allocation5 + $0x590] sm:$0xff]
        %v569 = vld [vmem:[#allocation5 + $0x598] sm:$0xff]
        %v570 = vld [vmem:[#allocation5 + $0x5a0] sm:$0xff]
        %v571 = vld [vmem:[#allocation5 + $0x5a8] sm:$0xff]
        %v572 = vld [vmem:[#allocation5 + $0x5b0] sm:$0xff]
        %v573 = vld [vmem:[#allocation5 + $0x5b8] sm:$0xff]
        %v574 = vld [vmem:[#allocation5 + $0x5c0] sm:$0xff]
        %v575 = vld [vmem:[#allocation5 + $0x5c8] sm:$0xff]
        %v576 = vld [vmem:[#allocation5 + $0x5d0] sm:$0xff]
        %v577 = vld [vmem:[#allocation5 + $0x5d8] sm:$0xff]
        %v578 = vld [vmem:[#allocation5 + $0x5e0] sm:$0xff]
        %v579 = vld [vmem:[#allocation5 + $0x5e8] sm:$0xff]
        %v580 = vld [vmem:[#allocation5 + $0x5f0] sm:$0xff]
        %v581 = vld [vmem:[#allocation5 + $0x5f8] sm:$0xff]
        %v582 = vld [vmem:[#allocation7] sm:$0x3f]
        %v584 = vlaneseq
        %v585 = vshrl.u32 %v584, 7
        %v586 = vsub.s32 0, %v585
        %v587 = vrot.slane %v582, %v586
        %v588 = vlaneseq
        %v589 = vshrl.u32 %v588, 7
        %v590 = vsub.s32 1, %v589
        %v591 = vrot.slane %v582, %v590
        %v592 = vlaneseq
        %v593 = vshrl.u32 %v592, 7
        %v594 = vsub.s32 2, %v593
        %v595 = vrot.slane %v582, %v594
        %v596 = vlaneseq
        %v597 = vshrl.u32 %v596, 7
        %v598 = vsub.s32 3, %v597
        %v599 = vrot.slane %v582, %v598
        %v600 = vlaneseq
        %v601 = vshrl.u32 %v600, 7
        %v602 = vsub.s32 4, %v601
        %v603 = vrot.slane %v582, %v602
        %v604 = vlaneseq
        %v605 = vshrl.u32 %v604, 7
        %v606 = vsub.s32 5, %v605
        %v607 = vrot.slane %v582, %v606
        %614 = vmatprep.subr.mxu0 %v391
        %615 = vmatpush1.msra.mxu0 %v390
        %616 = vmatprep.subr.mxu0 %v397
        %617 = vmatpush1.msra.mxu0 %v396
        %618 = vmatprep.subr.mxu0 %v403
        %619 = vmatpush1.msra.mxu0 %v402
        %620 = vmatprep.subr.mxu0 %v409
        %621 = vmatpush1.msra.mxu0 %v408
        %622 = vmatprep.subr.mxu0 %v415
        %623 = vmatpush1.msra.mxu0 %v414
        %624 = vmatprep.subr.mxu0 %v421
        %625 = vmatpush1.msra.mxu0 %v420
        %626 = vmatprep.subr.mxu0 %v427
        %627 = vmatpush1.msra.mxu0 %v426
        %628 = vmatprep.subr.mxu0 %v433
        %629 = vmatpush1.msra.mxu0 %v432
        %630 = vmatprep.subr.mxu0 %v439
        %631 = vmatpush1.msra.mxu0 %v438
        %632 = vmatprep.subr.mxu0 %v445
        %633 = vmatpush1.msra.mxu0 %v444
        %634 = vmatprep.subr.mxu0 %v451
        %635 = vmatpush1.msra.mxu0 %v450
        %636 = vmatprep.subr.mxu0 %v457
        %637 = vmatpush1.msra.mxu0 %v456
        %638 = vmatprep.subr.mxu0 %v463
        %639 = vmatpush1.msra.mxu0 %v462
        %640 = vmatprep.subr.mxu0 %v469
        %641 = vmatpush1.msra.mxu0 %v468
        %642 = vmatprep.subr.mxu0 %v475
        %643 = vmatpush1.msra.mxu0 %v474
        %644 = vmatprep.subr.mxu0 %v481
        %645 = vmatpush1.msra.mxu0 %v480
        %646 = vmatprep.subr.mxu0 %v487
        %647 = vmatpush1.msra.mxu0 %v486
        %648 = vmatprep.subr.mxu0 %v493
        %649 = vmatpush1.msra.mxu0 %v492
        %650 = vmatprep.subr.mxu0 %v499
        %651 = vmatpush1.msra.mxu0 %v498
        %652 = vmatprep.subr.mxu0 %v505
        %653 = vmatpush1.msra.mxu0 %v504
        %654 = vmatprep.subr.mxu0 %v511
        %655 = vmatpush1.msra.mxu0 %v510
        %656 = vmatprep.subr.mxu0 %v517
        %657 = vmatpush1.msra.mxu0 %v516
        %658 = vmatprep.subr.mxu0 %v523
        %659 = vmatpush1.msra.mxu0 %v522
        %660 = vmatprep.subr.mxu0 %v529
        %661 = vmatpush1.msra.mxu0 %v528
        %662 = vmatprep.subr.mxu0 %v535
        %663 = vmatpush1.msra.mxu0 %v534
        %664 = vmatprep.subr.mxu0 %v541
        %665 = vmatpush1.msra.mxu0 %v540
        %666 = vmatprep.subr.mxu0 %v547
        %667 = vmatpush1.msra.mxu0 %v546
        %668 = vmatprep.subr.mxu0 %v553
        %669 = vmatpush1.msra.mxu0 %v552
        %670 = vmatprep.subr.mxu0 %v559
        %671 = vmatpush1.msra.mxu0 %v558
        %672 = vmatprep.subr.mxu0 %v565
        %673 = vmatpush1.msra.mxu0 %v564
        %674 = vmatprep.subr.mxu0 %v571
        %675 = vmatpush1.msra.mxu0 %v570
        %676 = vmatprep.subr.mxu0 %v577
        %677 = vmatpush1.msra.mxu0 %v576
        %678 = vmatprep.mubr.f32.mxu0 %v389
        %679 = vmatmul.mubr.f32.gmra.mrb[0].mxu0 %v388
        %v680 = vpop.f32.mrb[0].mxu0
        %v681 = vadd.f32 %v587, %v680
        %v682 = vpop.f32.mrb[0].mxu0
        %v683 = vadd.f32 %v591, %v682
        %684 = vdwg.mxu0
        %685 = vmatprep.subr.mxu0 %v393
        %686 = vmatpush1.msra.mxu0 %v392
        %687 = vmatprep.subr.mxu0 %v399
        %688 = vmatpush1.msra.mxu0 %v398
        %689 = vmatprep.subr.mxu0 %v405
        %690 = vmatpush1.msra.mxu0 %v404
        %691 = vmatprep.subr.mxu0 %v411
        %692 = vmatpush1.msra.mxu0 %v410
        %693 = vmatprep.subr.mxu0 %v417
        %694 = vmatpush1.msra.mxu0 %v416
        %695 = vmatprep.subr.mxu0 %v423
        %696 = vmatpush1.msra.mxu0 %v422
        %697 = vmatprep.subr.mxu0 %v429
        %698 = vmatpush1.msra.mxu0 %v428
        %699 = vmatprep.subr.mxu0 %v435
        %700 = vmatpush1.msra.mxu0 %v434
        %701 = vmatprep.subr.mxu0 %v441
        %702 = vmatpush1.msra.mxu0 %v440
        %703 = vmatprep.subr.mxu0 %v447
        %704 = vmatpush1.msra.mxu0 %v446
        %705 = vmatprep.subr.mxu0 %v453
        %706 = vmatpush1.msra.mxu0 %v452
        %707 = vmatprep.subr.mxu0 %v459
        %708 = vmatpush1.msra.mxu0 %v458
        %709 = vmatprep.subr.mxu0 %v465
        %710 = vmatpush1.msra.mxu0 %v464
        %711 = vmatprep.subr.mxu0 %v471
        %712 = vmatpush1.msra.mxu0 %v470
        %713 = vmatprep.subr.mxu0 %v477
        %714 = vmatpush1.msra.mxu0 %v476
        %715 = vmatprep.subr.mxu0 %v483
        %716 = vmatpush1.msra.mxu0 %v482
        %717 = vmatprep.subr.mxu0 %v489
        %718 = vmatpush1.msra.mxu0 %v488
        %719 = vmatprep.subr.mxu0 %v495
        %720 = vmatpush1.msra.mxu0 %v494
        %721 = vmatprep.subr.mxu0 %v501
        %722 = vmatpush1.msra.mxu0 %v500
        %723 = vmatprep.subr.mxu0 %v507
        %724 = vmatpush1.msra.mxu0 %v506
        %725 = vmatprep.subr.mxu0 %v513
        %726 = vmatpush1.msra.mxu0 %v512
        %727 = vmatprep.subr.mxu0 %v519
        %728 = vmatpush1.msra.mxu0 %v518
        %729 = vmatprep.subr.mxu0 %v525
        %730 = vmatpush1.msra.mxu0 %v524
        %731 = vmatprep.subr.mxu0 %v531
        %732 = vmatpush1.msra.mxu0 %v530
        %733 = vmatprep.subr.mxu0 %v537
        %734 = vmatpush1.msra.mxu0 %v536
        %735 = vmatprep.subr.mxu0 %v543
        %736 = vmatpush1.msra.mxu0 %v542
        %737 = vmatprep.subr.mxu0 %v549
        %738 = vmatpush1.msra.mxu0 %v548
        %739 = vmatprep.subr.mxu0 %v555
        %740 = vmatpush1.msra.mxu0 %v554
        %741 = vmatprep.subr.mxu0 %v561
        %742 = vmatpush1.msra.mxu0 %v560
        %743 = vmatprep.subr.mxu0 %v567
        %744 = vmatpush1.msra.mxu0 %v566
        %745 = vmatprep.subr.mxu0 %v573
        %746 = vmatpush1.msra.mxu0 %v572
        %747 = vmatprep.subr.mxu0 %v579
        %748 = vmatpush1.msra.mxu0 %v578
        %749 = vmatprep.mubr.f32.mxu0 %v389
        %750 = vmatmul.mubr.f32.gmra.mrb[0].mxu0 %v388
        %v751 = vpop.f32.mrb[0].mxu0
        %v752 = vadd.f32 %v595, %v751
        %v753 = vpop.f32.mrb[0].mxu0
        %v754 = vadd.f32 %v599, %v753
        %755 = vdwg.mxu0
        %756 = vmatprep.subr.mxu0 %v395
        %757 = vmatpush1.msra.mxu0 %v394
        %758 = vmatprep.subr.mxu0 %v401
        %759 = vmatpush1.msra.mxu0 %v400
        %760 = vmatprep.subr.mxu0 %v407
        %761 = vmatpush1.msra.mxu0 %v406
        %762 = vmatprep.subr.mxu0 %v413
        %763 = vmatpush1.msra.mxu0 %v412
        %764 = vmatprep.subr.mxu0 %v419
        %765 = vmatpush1.msra.mxu0 %v418
        %766 = vmatprep.subr.mxu0 %v425
        %767 = vmatpush1.msra.mxu0 %v424
        %768 = vmatprep.subr.mxu0 %v431
        %769 = vmatpush1.msra.mxu0 %v430
        %770 = vmatprep.subr.mxu0 %v437
        %771 = vmatpush1.msra.mxu0 %v436
        %772 = vmatprep.subr.mxu0 %v443
        %773 = vmatpush1.msra.mxu0 %v442
        %774 = vmatprep.subr.mxu0 %v449
        %775 = vmatpush1.msra.mxu0 %v448
        %776 = vmatprep.subr.mxu0 %v455
        %777 = vmatpush1.msra.mxu0 %v454
        %778 = vmatprep.subr.mxu0 %v461
        %779 = vmatpush1.msra.mxu0 %v460
        %780 = vmatprep.subr.mxu0 %v467
        %781 = vmatpush1.msra.mxu0 %v466
        %782 = vmatprep.subr.mxu0 %v473
        %783 = vmatpush1.msra.mxu0 %v472
        %784 = vmatprep.subr.mxu0 %v479
        %785 = vmatpush1.msra.mxu0 %v478
        %786 = vmatprep.subr.mxu0 %v485
        %787 = vmatpush1.msra.mxu0 %v484
        %788 = vmatprep.subr.mxu0 %v491
        %789 = vmatpush1.msra.mxu0 %v490
        %790 = vmatprep.subr.mxu0 %v497
        %791 = vmatpush1.msra.mxu0 %v496
        %792 = vmatprep.subr.mxu0 %v503
        %793 = vmatpush1.msra.mxu0 %v502
        %794 = vmatprep.subr.mxu0 %v509
        %795 = vmatpush1.msra.mxu0 %v508
        %796 = vmatprep.subr.mxu0 %v515
        %797 = vmatpush1.msra.mxu0 %v514
        %798 = vmatprep.subr.mxu0 %v521
        %799 = vmatpush1.msra.mxu0 %v520
        %800 = vmatprep.subr.mxu0 %v527
        %801 = vmatpush1.msra.mxu0 %v526
        %802 = vmatprep.subr.mxu0 %v533
        %803 = vmatpush1.msra.mxu0 %v532
        %804 = vmatprep.subr.mxu0 %v539
        %805 = vmatpush1.msra.mxu0 %v538
        %806 = vmatprep.subr.mxu0 %v545
        %807 = vmatpush1.msra.mxu0 %v544
        %808 = vmatprep.subr.mxu0 %v551
        %809 = vmatpush1.msra.mxu0 %v550
        %810 = vmatprep.subr.mxu0 %v557
        %811 = vmatpush1.msra.mxu0 %v556
        %812 = vmatprep.subr.mxu0 %v563
        %813 = vmatpush1.msra.mxu0 %v562
        %814 = vmatprep.subr.mxu0 %v569
        %815 = vmatpush1.msra.mxu0 %v568
        %816 = vmatprep.subr.mxu0 %v575
        %817 = vmatpush1.msra.mxu0 %v574
        %818 = vmatprep.subr.mxu0 %v581
        %819 = vmatpush1.msra.mxu0 %v580
        %820 = vmatprep.mubr.f32.mxu0 %v389
        %821 = vmatmul.mubr.f32.gmra.mrb[0].mxu0 %v388
        %v822 = vpop.f32.mrb[0].mxu0
        %v823 = vadd.f32 %v603, %v822
        %v824 = vpop.f32.mrb[0].mxu0
        %v825 = vadd.f32 %v607, %v824
        %826 = vdwg.mxu0
        %v827 = vld [vmem:[%s387] sm:$0x1]
        %v828 = vld [vmem:[%s3] sm:$0xff]
        %v829 = vld [vmem:[#allocation8] sm:$0xff]
        %v830 = vld [vmem:[%s5] sm:$0xff]
        %v831 = vld [vmem:[#allocation10] sm:$0xff]
        %v832 = vmul.f32 %v681, %v828
        %833 = vrot.lane.b32.xlu0 %v681, 64
        %v834 = vpop.permute.xlu0 %833
        %v835 = vmul.f32 %v834, %v829
        %v836 = vadd.f32 %v832, %v835
        %v837 = vmul.f32 %v752, %v830
        %838 = vrot.lane.b32.xlu0 %v752, 64
        %v839 = vpop.permute.xlu0 %838
        %v840 = vmul.f32 %v839, %v831
        %v841 = vadd.f32 %v837, %v840
        %v843 = vlaneseq
        %v844 = vshrl.u32 %v843, 7
        %v845 = vsub.s32 0, %v844
        %v846 = vrot.slane %v827, %v845
        %848 = vmatprep.subr.mxu0 0.0
        %849 = vmatpush1.xpose.msra.mxu0 %v841
        %850 = vmatprep.subr.mxu0 0.0
        %851 = vmatpush1.xpose.msra.mxu0 0.0
        %852 = vmatprep.subr.mxu0 0.0
        %853 = vmatpush1.xpose.msra.mxu0 0.0
        %854 = vmatprep.subr.mxu0 0.0
        %855 = vmatpush1.xpose.msra.mxu0 0.0
        %856 = vmatprep.subr.mxu0 0.0
        %857 = vmatpush1.xpose.msra.mxu0 0.0
        %858 = vmatprep.subr.mxu0 0.0
        %859 = vmatpush1.xpose.msra.mxu0 0.0
        %860 = vmatprep.subr.mxu0 0.0
        %861 = vmatpush1.xpose.msra.mxu0 0.0
        %862 = vmatprep.subr.mxu0 0.0
        %863 = vmatpush1.xpose.msra.mxu0 0.0
        %864 = vmatprep.subr.mxu0 0.0
        %865 = vmatpush1.xpose.msra.mxu0 0.0
        %866 = vmatprep.subr.mxu0 0.0
        %867 = vmatpush1.xpose.msra.mxu0 0.0
        %868 = vmatprep.subr.mxu0 0.0
        %869 = vmatpush1.xpose.msra.mxu0 0.0
        %870 = vmatprep.subr.mxu0 0.0
        %871 = vmatpush1.xpose.msra.mxu0 0.0
        %872 = vmatprep.subr.mxu0 0.0
        %873 = vmatpush1.xpose.msra.mxu0 0.0
        %874 = vmatprep.subr.mxu0 0.0
        %875 = vmatpush1.xpose.msra.mxu0 0.0
        %876 = vmatprep.subr.mxu0 0.0
        %877 = vmatpush1.xpose.msra.mxu0 0.0
        %878 = vmatprep.subr.mxu0 0.0
        %879 = vmatpush1.xpose.msra.mxu0 0.0
        %880 = vmatprep.subr.mxu0 0.0
        %881 = vmatpush1.xpose.msra.mxu0 0.0
        %882 = vmatprep.subr.mxu0 0.0
        %883 = vmatpush1.xpose.msra.mxu0 0.0
        %884 = vmatprep.subr.mxu0 0.0
        %885 = vmatpush1.xpose.msra.mxu0 0.0
        %886 = vmatprep.subr.mxu0 0.0
        %887 = vmatpush1.xpose.msra.mxu0 0.0
        %888 = vmatprep.subr.mxu0 0.0
        %889 = vmatpush1.xpose.msra.mxu0 0.0
        %890 = vmatprep.subr.mxu0 0.0
        %891 = vmatpush1.xpose.msra.mxu0 0.0
        %892 = vmatprep.subr.mxu0 0.0
        %893 = vmatpush1.xpose.msra.mxu0 0.0
        %894 = vmatprep.subr.mxu0 0.0
        %895 = vmatpush1.xpose.msra.mxu0 0.0
        %896 = vmatprep.subr.mxu0 0.0
        %897 = vmatpush1.xpose.msra.mxu0 0.0
        %898 = vmatprep.subr.mxu0 0.0
        %899 = vmatpush1.xpose.msra.mxu0 0.0
        %900 = vmatprep.subr.mxu0 0.0
        %901 = vmatpush1.xpose.msra.mxu0 0.0
        %902 = vmatprep.subr.mxu0 0.0
        %903 = vmatpush1.xpose.msra.mxu0 0.0
        %904 = vmatprep.subr.mxu0 0.0
        %905 = vmatpush1.xpose.msra.mxu0 0.0
        %906 = vmatprep.subr.mxu0 0.0
        %907 = vmatpush1.xpose.msra.mxu0 0.0
        %908 = vmatprep.subr.mxu0 0.0
        %909 = vmatpush1.xpose.msra.mxu0 0.0
        %910 = vmatprep.subr.mxu0 0.0
        %911 = vmatpush1.xpose.msra.mxu0 0.0
        %912 = vmatprep.mubr.f32.mxu0 0.0
        %913 = vmatmul.mubr.f32.gmra.mrb[0].mxu0 %v836
        %v914 = vpop.f32.mrb[0].mxu0
        %v915 = vadd.f32 %v846, %v914
        %v916 = vpop.f32.mrb[0].mxu0
        %917 = vdwg.mxu0
        %vm918 = vcmask 64512
        %v919 = vsel %vm918, %v915, -inf
        %920 = vmax.xlane.f32.xlu0 %v919
        %v921 = vpop.xlane.xlu0 %920
        %v922 = vsub.f32 %v915, %v921
        %v923 = vmul.f32 %v922, 1.442695
        %v924 = vpow.pop %v923
        %v925 = vsel %vm918, %v924, 0.0
        %926 = vadd.xlane.f32.xlu0 %v925
        %v927 = vpop.xlane.xlu0 %926
        %v928 = vrcp.pop %v927
        %v929 = vmul.f32 %v924, %v928
        %v931 = vsel %vm918, %v929, 0
        %933 = vmatprep.subr.mxu0 0.0
        %934 = vmatpush1.msra.mxu0 %v823
        %935 = vmatprep.subr.mxu0 0.0
        %936 = vmatpush1.msra.mxu0 0.0
        %937 = vmatprep.subr.mxu0 0.0
        %938 = vmatpush1.msra.mxu0 0.0
        %939 = vmatprep.subr.mxu0 0.0
        %940 = vmatpush1.msra.mxu0 0.0
        %941 = vmatprep.subr.mxu0 0.0
        %942 = vmatpush1.msra.mxu0 0.0
        %943 = vmatprep.subr.mxu0 0.0
        %944 = vmatpush1.msra.mxu0 0.0
        %945 = vmatprep.subr.mxu0 0.0
        %946 = vmatpush1.msra.mxu0 0.0
        %947 = vmatprep.subr.mxu0 0.0
        %948 = vmatpush1.msra.mxu0 0.0
        %949 = vmatprep.subr.mxu0 0.0
        %950 = vmatpush1.msra.mxu0 0.0
        %951 = vmatprep.subr.mxu0 0.0
        %952 = vmatpush1.msra.mxu0 0.0
        %953 = vmatprep.subr.mxu0 0.0
        %954 = vmatpush1.msra.mxu0 0.0
        %955 = vmatprep.subr.mxu0 0.0
        %956 = vmatpush1.msra.mxu0 0.0
        %957 = vmatprep.subr.mxu0 0.0
        %958 = vmatpush1.msra.mxu0 0.0
        %959 = vmatprep.subr.mxu0 0.0
        %960 = vmatpush1.msra.mxu0 0.0
        %961 = vmatprep.subr.mxu0 0.0
        %962 = vmatpush1.msra.mxu0 0.0
        %963 = vmatprep.subr.mxu0 0.0
        %964 = vmatpush1.msra.mxu0 0.0
        %965 = vmatprep.subr.mxu0 0.0
        %966 = vmatpush1.msra.mxu0 0.0
        %967 = vmatprep.subr.mxu0 0.0
        %968 = vmatpush1.msra.mxu0 0.0
        %969 = vmatprep.subr.mxu0 0.0
        %970 = vmatpush1.msra.mxu0 0.0
        %971 = vmatprep.subr.mxu0 0.0
        %972 = vmatpush1.msra.mxu0 0.0
        %973 = vmatprep.subr.mxu0 0.0
        %974 = vmatpush1.msra.mxu0 0.0
        %975 = vmatprep.subr.mxu0 0.0
        %976 = vmatpush1.msra.mxu0 0.0
        %977 = vmatprep.subr.mxu0 0.0
        %978 = vmatpush1.msra.mxu0 0.0
        %979 = vmatprep.subr.mxu0 0.0
        %980 = vmatpush1.msra.mxu0 0.0
        %981 = vmatprep.subr.mxu0 0.0
        %982 = vmatpush1.msra.mxu0 0.0
        %983 = vmatprep.subr.mxu0 0.0
        %984 = vmatpush1.msra.mxu0 0.0
        %985 = vmatprep.subr.mxu0 0.0
        %986 = vmatpush1.msra.mxu0 0.0
        %987 = vmatprep.subr.mxu0 0.0
        %988 = vmatpush1.msra.mxu0 0.0
        %989 = vmatprep.subr.mxu0 0.0
        %990 = vmatpush1.msra.mxu0 0.0
        %991 = vmatprep.subr.mxu0 0.0
        %992 = vmatpush1.msra.mxu0 0.0
        %993 = vmatprep.subr.mxu0 0.0
        %994 = vmatpush1.msra.mxu0 0.0
        %995 = vmatprep.subr.mxu0 0.0
        %996 = vmatpush1.msra.mxu0 0.0
        %997 = vmatprep.mubr.f32.mxu0 0.0
        %998 = vmatmul.mubr.f32.gmra.mrb[0].mxu0 %v931
        %v999 = vpop.f32.mrb[0].mxu0
        %v1000 = vadd.f32 0.0, %v999
        %v1001 = vpop.f32.mrb[0].mxu0
        %1002 = vdwg.mxu0
        %1003 = vst [vmem:[%s384] sm:$0xff] %v1000
        %v1004 = vmul.f32 %v683, %v828
        %1005 = vrot.lane.b32.xlu0 %v683, 64
        %v1006 = vpop.permute.xlu0 %1005
        %v1007 = vmul.f32 %v1006, %v829
        %v1008 = vadd.f32 %v1004, %v1007
        %v1009 = vmul.f32 %v754, %v830
        %1010 = vrot.lane.b32.xlu0 %v754, 64
        %v1011 = vpop.permute.xlu0 %1010
        %v1012 = vmul.f32 %v1011, %v831
        %v1013 = vadd.f32 %v1009, %v1012
        %1014 = vmatprep.subr.mxu0 0.0
        %1015 = vmatpush1.xpose.msra.mxu0 %v1013
        %1016 = vmatprep.subr.mxu0 0.0
        %1017 = vmatpush1.xpose.msra.mxu0 0.0
        %1018 = vmatprep.subr.mxu0 0.0
        %1019 = vmatpush1.xpose.msra.mxu0 0.0
        %1020 = vmatprep.subr.mxu0 0.0
        %1021 = vmatpush1.xpose.msra.mxu0 0.0
        %1022 = vmatprep.subr.mxu0 0.0
        %1023 = vmatpush1.xpose.msra.mxu0 0.0
        %1024 = vmatprep.subr.mxu0 0.0
        %1025 = vmatpush1.xpose.msra.mxu0 0.0
        %1026 = vmatprep.subr.mxu0 0.0
        %1027 = vmatpush1.xpose.msra.mxu0 0.0
        %1028 = vmatprep.subr.mxu0 0.0
        %1029 = vmatpush1.xpose.msra.mxu0 0.0
        %1030 = vmatprep.subr.mxu0 0.0
        %1031 = vmatpush1.xpose.msra.mxu0 0.0
        %1032 = vmatprep.subr.mxu0 0.0
        %1033 = vmatpush1.xpose.msra.mxu0 0.0
        %1034 = vmatprep.subr.mxu0 0.0
        %1035 = vmatpush1.xpose.msra.mxu0 0.0
        %1036 = vmatprep.subr.mxu0 0.0
        %1037 = vmatpush1.xpose.msra.mxu0 0.0
        %1038 = vmatprep.subr.mxu0 0.0
        %1039 = vmatpush1.xpose.msra.mxu0 0.0
        %1040 = vmatprep.subr.mxu0 0.0
        %1041 = vmatpush1.xpose.msra.mxu0 0.0
        %1042 = vmatprep.subr.mxu0 0.0
        %1043 = vmatpush1.xpose.msra.mxu0 0.0
        %1044 = vmatprep.subr.mxu0 0.0
        %1045 = vmatpush1.xpose.msra.mxu0 0.0
        %1046 = vmatprep.subr.mxu0 0.0
        %1047 = vmatpush1.xpose.msra.mxu0 0.0
        %1048 = vmatprep.subr.mxu0 0.0
        %1049 = vmatpush1.xpose.msra.mxu0 0.0
        %1050 = vmatprep.subr.mxu0 0.0
        %1051 = vmatpush1.xpose.msra.mxu0 0.0
        %1052 = vmatprep.subr.mxu0 0.0
        %1053 = vmatpush1.xpose.msra.mxu0 0.0
        %1054 = vmatprep.subr.mxu0 0.0
        %1055 = vmatpush1.xpose.msra.mxu0 0.0
        %1056 = vmatprep.subr.mxu0 0.0
        %1057 = vmatpush1.xpose.msra.mxu0 0.0
        %1058 = vmatprep.subr.mxu0 0.0
        %1059 = vmatpush1.xpose.msra.mxu0 0.0
        %1060 = vmatprep.subr.mxu0 0.0
        %1061 = vmatpush1.xpose.msra.mxu0 0.0
        %1062 = vmatprep.subr.mxu0 0.0
        %1063 = vmatpush1.xpose.msra.mxu0 0.0
        %1064 = vmatprep.subr.mxu0 0.0
        %1065 = vmatpush1.xpose.msra.mxu0 0.0
        %1066 = vmatprep.subr.mxu0 0.0
        %1067 = vmatpush1.xpose.msra.mxu0 0.0
        %1068 = vmatprep.subr.mxu0 0.0
        %1069 = vmatpush1.xpose.msra.mxu0 0.0
        %1070 = vmatprep.subr.mxu0 0.0
        %1071 = vmatpush1.xpose.msra.mxu0 0.0
        %1072 = vmatprep.subr.mxu0 0.0
        %1073 = vmatpush1.xpose.msra.mxu0 0.0
        %1074 = vmatprep.subr.mxu0 0.0
        %1075 = vmatpush1.xpose.msra.mxu0 0.0
        %1076 = vmatprep.subr.mxu0 0.0
        %1077 = vmatpush1.xpose.msra.mxu0 0.0
        %1078 = vmatprep.mubr.f32.mxu0 0.0
        %1079 = vmatmul.mubr.f32.gmra.mrb[0].mxu0 %v1008
        %v1080 = vpop.f32.mrb[0].mxu0
        %v1081 = vadd.f32 %v846, %v1080
        %v1082 = vpop.f32.mrb[0].mxu0
        %1083 = vdwg.mxu0
        %v1084 = vsel %vm918, %v1081, -inf
        %1085 = vmax.xlane.f32.xlu0 %v1084
        %v1086 = vpop.xlane.xlu0 %1085
        %v1087 = vsub.f32 %v1081, %v1086
        %v1088 = vmul.f32 %v1087, 1.442695
        %v1089 = vpow.pop %v1088
        %v1090 = vsel %vm918, %v1089, 0.0
        %1091 = vadd.xlane.f32.xlu0 %v1090
        %v1092 = vpop.xlane.xlu0 %1091
        %v1093 = vrcp.pop %v1092
        %v1094 = vmul.f32 %v1089, %v1093
        %v1096 = vsel %vm918, %v1094, 0
        %1098 = vmatprep.subr.mxu0 0.0
        %1099 = vmatpush1.msra.mxu0 %v825
        %1100 = vmatprep.subr.mxu0 0.0
        %1101 = vmatpush1.msra.mxu0 0.0
        %1102 = vmatprep.subr.mxu0 0.0
        %1103 = vmatpush1.msra.mxu0 0.0
        %1104 = vmatprep.subr.mxu0 0.0
        %1105 = vmatpush1.msra.mxu0 0.0
        %1106 = vmatprep.subr.mxu0 0.0
        %1107 = vmatpush1.msra.mxu0 0.0
        %1108 = vmatprep.subr.mxu0 0.0
        %1109 = vmatpush1.msra.mxu0 0.0
        %1110 = vmatprep.subr.mxu0 0.0
        %1111 = vmatpush1.msra.mxu0 0.0
        %1112 = vmatprep.subr.mxu0 0.0
        %1113 = vmatpush1.msra.mxu0 0.0
        %1114 = vmatprep.subr.mxu0 0.0
        %1115 = vmatpush1.msra.mxu0 0.0
        %1116 = vmatprep.subr.mxu0 0.0
        %1117 = vmatpush1.msra.mxu0 0.0
        %1118 = vmatprep.subr.mxu0 0.0
        %1119 = vmatpush1.msra.mxu0 0.0
        %1120 = vmatprep.subr.mxu0 0.0
        %1121 = vmatpush1.msra.mxu0 0.0
        %1122 = vmatprep.subr.mxu0 0.0
        %1123 = vmatpush1.msra.mxu0 0.0
        %1124 = vmatprep.subr.mxu0 0.0
        %1125 = vmatpush1.msra.mxu0 0.0
        %1126 = vmatprep.subr.mxu0 0.0
        %1127 = vmatpush1.msra.mxu0 0.0
        %1128 = vmatprep.subr.mxu0 0.0
        %1129 = vmatpush1.msra.mxu0 0.0
        %1130 = vmatprep.subr.mxu0 0.0
        %1131 = vmatpush1.msra.mxu0 0.0
        %1132 = vmatprep.subr.mxu0 0.0
        %1133 = vmatpush1.msra.mxu0 0.0
        %1134 = vmatprep.subr.mxu0 0.0
        %1135 = vmatpush1.msra.mxu0 0.0
        %1136 = vmatprep.subr.mxu0 0.0
        %1137 = vmatpush1.msra.mxu0 0.0
        %1138 = vmatprep.subr.mxu0 0.0
        %1139 = vmatpush1.msra.mxu0 0.0
        %1140 = vmatprep.subr.mxu0 0.0
        %1141 = vmatpush1.msra.mxu0 0.0
        %1142 = vmatprep.subr.mxu0 0.0
        %1143 = vmatpush1.msra.mxu0 0.0
        %1144 = vmatprep.subr.mxu0 0.0
        %1145 = vmatpush1.msra.mxu0 0.0
        %1146 = vmatprep.subr.mxu0 0.0
        %1147 = vmatpush1.msra.mxu0 0.0
        %1148 = vmatprep.subr.mxu0 0.0
        %1149 = vmatpush1.msra.mxu0 0.0
        %1150 = vmatprep.subr.mxu0 0.0
        %1151 = vmatpush1.msra.mxu0 0.0
        %1152 = vmatprep.subr.mxu0 0.0
        %1153 = vmatpush1.msra.mxu0 0.0
        %1154 = vmatprep.subr.mxu0 0.0
        %1155 = vmatpush1.msra.mxu0 0.0
        %1156 = vmatprep.subr.mxu0 0.0
        %1157 = vmatpush1.msra.mxu0 0.0
        %1158 = vmatprep.subr.mxu0 0.0
        %1159 = vmatpush1.msra.mxu0 0.0
        %1160 = vmatprep.subr.mxu0 0.0
        %1161 = vmatpush1.msra.mxu0 0.0
        %1162 = vmatprep.mubr.f32.mxu0 0.0
        %1163 = vmatmul.mubr.f32.gmra.mrb[0].mxu0 %v1096
        %v1164 = vpop.f32.mrb[0].mxu0
        %v1165 = vadd.f32 0.0, %v1164
        %v1166 = vpop.f32.mrb[0].mxu0
        %1167 = vdwg.mxu0
        %1168 = vst [vmem:[%s384 + $0x8] sm:$0xff] %v1165
        %s1169 = sand.u32 %s213, 1
        %s1170 = scalar_lea.sflag [#allocation4], %s1169
        %s1171 = sand.u32 %s213, 1
        %s1172 = smul.addr %s1171, 16
        %s1173 = scalar_lea.vmem [#allocation11], %s1172
        // Predicated region
        $region73: #{tpu_custom_call.1} parent=51 // pred_check
          %p1174 = pneg %p223
        $region74: #{tpu_custom_call.1} parent=51 // pred_check_branch
          %1176 = sbr.rel (%p1174) target = $region76
        $region75: #{tpu_custom_call.1} parent=51 // pred_region
          %s1178 = ssub.s32 256, 256
          %1179 = vsyncadd %s1170, %s1178
          %s1180 = smul.addr %s27, 2
          %s1181 = smul.addr %s1180, 128
          %s1182 = scalar_lea.hbm %s8, %s1181
          %s1184 = sshll.u32 %s1173, 4
          %s1185 = int_to_ptr.vmem [resolvable:$true] %s1184
          %1187 = dma.vmem_to_hbm [thread:$0]  %s1185, 256, %s1182, %s1170
        $region76: #{tpu_custom_call.1} parent=51 // pred_fallthru
          _
      $region52: #{tpu_custom_call.1} parent=5 // pred_fallthru
        _
      %p1188 = scmp.le.s32.totalorder 2, %s22
      // Predicated region
      $region77: #{tpu_custom_call.1} parent=5 // pred_check
        %p1189 = pneg %p1188
      $region78: #{tpu_custom_call.1} parent=5 // pred_check_branch
        %1191 = sbr.rel (%p1189) target = $region80
      $region79: #{tpu_custom_call.1} parent=5 // pred_region
        %s1192 = ssub.s32 %s22, 2
        // Predicated region
        $region81: #{tpu_custom_call.1} parent=79 // pred_check
          %p1193 = pneg %p229
        $region82: #{tpu_custom_call.1} parent=79 // pred_check_branch
          %1195 = sbr.rel (%p1193) target = $region84
        $region83: #{tpu_custom_call.1} parent=79 // pred_region
          %s1196 = sand.u32 %s214, 1
          %s1197 = scalar_lea.sflag [#allocation4], %s1196
          %s1198 = sand.u32 %s214, 1
          %s1199 = smul.addr %s1198, 16
          %s1200 = scalar_lea.vmem [#allocation11], %s1199
          %1201 = dma.done %s1197, 256
        $region84: #{tpu_custom_call.1} parent=79 // pred_fallthru
          _
      $region80: #{tpu_custom_call.1} parent=5 // pred_fallthru
        _
    $region6: #{tpu_custom_call.1} parent=1 // loop_footer
      %s26 = sadd.s32 1, %s22
    $region7: #{tpu_custom_call.1} parent=1 // loop_footer_branch
      %21 = sbr.rel target = $region3
    $region8: #{tpu_custom_call.1} parent=1 // loop_exit
      _
    %1202 = vsyncpa [#allocation3], 1
    %s1203 = scalar_lea.sflag [#allocation3], 1
    %1204 = vsyncpa %s1203, 1
    %1205 = vsyncpa [#allocation6], 1
    %1206 = vsyncpa [#allocation9], 1
    %1207 = vsyncpa [#allocation4], 1
    %s1208 = scalar_lea.sflag [#allocation4], 1
    %1209 = vsyncpa %s1208, 1

</llo_original>
